<compile_context>
chip_gen: v7x
topology: tpu7x:2x2x1
jax: 0.10.0
libtpu: 0.0.40
codegen_flags: <defaults>
</compile_context>

<pallas_src>
import functools

import jax
import jax.numpy as jnp
from jax import lax
from jax.experimental import pallas as pl
from jax.experimental.pallas import tpu as pltpu


def _lstm_bc_kernel(sent_ref, embd_ref, wx_ref, wh_ref, b_ref, wl_ref, bl_ref,
                    x_ref, lstm_out_ref, y_ref, logp_ref, *,
                    seq_len, batch, hidden_dim, vocab_size):
    """Fused embedding + whole-sequence LSTM + linear + log_softmax."""
    H = hidden_dim
    B = batch
    N = seq_len * B

    # ---- Fused embedding lookup (exact one-hot matmul, no dynamic gather) ----
    sent = sent_ref[...]                                          # (N, 1) int32
    vocab_iota = lax.broadcasted_iota(jnp.int32, (N, vocab_size), 1)
    onehot = (sent == vocab_iota).astype(jnp.float32)             # (N, V)
    x2d = jnp.dot(onehot, embd_ref[...],
                  preferred_element_type=jnp.float32)             # (N, E)
    x_ref[...] = x2d

    # ---- Hoisted input projection + bias for ALL timesteps at once ----------
    # (N, E) @ (E, 4H) + (1, 4H)  -> (N, 4H); 4H = 128 is lane-dense.
    gx_all = (jnp.dot(x2d, wx_ref[...], preferred_element_type=jnp.float32)
              + b_ref[...])

    wh = wh_ref[...]                                              # (H, 4H)

    # PyTorch init_hidden(): zero h0 / c0, carried in vregs.
    h = jnp.zeros((B, H), jnp.float32)
    c = jnp.zeros((B, H), jnp.float32)
    hs = []

    # seq_len is static & tiny -> fully unrolled straight-line recurrence.
    for t in range(seq_len):
        # Only the recurrent matmul remains on the serial critical path.
        gates = (gx_all[t * B:(t + 1) * B, :]
                 + jnp.dot(h, wh, preferred_element_type=jnp.float32))  # (B, 4H)
        # Two full-width activations, then lane slices (gate order i,f,g,o).
        s = jax.nn.sigmoid(gates)
        tg = jnp.tanh(gates)
        i_g = s[:, 0 * H:1 * H]
        f_g = s[:, 1 * H:2 * H]
        g_g = tg[:, 2 * H:3 * H]
        o_g = s[:, 3 * H:4 * H]
        c = f_g * c + i_g * g_g
        h = o_g * jnp.tanh(c)
        hs.append(h)

    # Single lane-dense writeback: (B, seq_len*H) = (2, 256).
    lstm_out_ref[...] = jnp.concatenate(hs, axis=1)

    # y = h_last @ W_label.T + b_label  (W_label pre-transposed -> (H, L)).
    y = jnp.dot(h, wl_ref[...], preferred_element_type=jnp.float32) + bl_ref[...]
    y_ref[...] = y
    # Stable log_softmax over the label dimension.
    m = jnp.max(y, axis=-1, keepdims=True)
    lse = jnp.log(jnp.sum(jnp.exp(y - m), axis=-1, keepdims=True)) + m
    logp_ref[...] = y - lse


@jax.jit
def lstm_bc_forward(sentence, embd, w_ih, w_hh, b_ih, b_hh, w_lab, b_lab):
    """Returns (y, lstm_out, x, log_probs) exactly like LSTMBC.forward."""
    seq_len, batch = sentence.shape
    V, E = embd.shape
    H = w_hh.shape[1]
    L = w_lab.shape[0]

    # Wrapper-side prep: flatten token ids to (seq*B, 1); pre-transpose weights
    # so in-kernel matmuls are (rows, K) @ (K, 4H/L) with lane-dense outputs;
    # biases as 2-D rows.
    sent2d = sentence.reshape(seq_len * batch, 1).astype(jnp.int32)
    wx_t = w_ih.T.astype(jnp.float32)                               # (E, 4H)
    wh_t = w_hh.T.astype(jnp.float32)                               # (H, 4H)
    bias = (b_ih + b_hh).reshape(1, 4 * H).astype(jnp.float32)      # (1, 4H)
    wl_t = w_lab.T.astype(jnp.float32)                              # (H, L)
    bl2 = b_lab.reshape(1, L).astype(jnp.float32)                   # (1, L)

    kernel = functools.partial(_lstm_bc_kernel, seq_len=seq_len, batch=batch,
                               hidden_dim=H, vocab_size=V)

    vmem = pl.BlockSpec(memory_space=pltpu.MemorySpace.VMEM)
    x2d, lstm_slab, y, log_probs = pl.pallas_call(
        kernel,
        out_shape=(
            jax.ShapeDtypeStruct((seq_len * batch, E), jnp.float32),   # x
            jax.ShapeDtypeStruct((batch, seq_len * H), jnp.float32),   # lstm_out slab
            jax.ShapeDtypeStruct((batch, L), jnp.float32),             # y
            jax.ShapeDtypeStruct((batch, L), jnp.float32),             # log_probs
        ),
        in_specs=[vmem] * 7,
        out_specs=(vmem, vmem, vmem, vmem),
    )(sent2d, embd.astype(jnp.float32), wx_t, wh_t, bias, wl_t, bl2)

    x = x2d.reshape(seq_len, batch, E)
    lstm_out = lstm_slab.reshape(batch, seq_len, H).transpose(1, 0, 2)
    return y, lstm_out, x, log_probs


def _reference_forward(sentence, embd, w_ih, w_hh, b_ih, b_hh, w_lab, b_lab):
    """Pure-JAX reference mirroring torch.nn.LSTM semantics."""
    H = w_hh.shape[1]
    x = jnp.take(embd, sentence, axis=0).astype(jnp.float32)
    B = x.shape[1]

    def step(carry, x_t):
        h, c = carry
        gates = x_t @ w_ih.T + h @ w_hh.T + b_ih + b_hh
        i = jax.nn.sigmoid(gates[:, 0:H])
        f = jax.nn.sigmoid(gates[:, H:2 * H])
        g = jnp.tanh(gates[:, 2 * H:3 * H])
        o = jax.nn.sigmoid(gates[:, 3 * H:4 * H])
        c = f * c + i * g
        h = o * jnp.tanh(c)
        return (h, c), h

    init = (jnp.zeros((B, H), jnp.float32), jnp.zeros((B, H), jnp.float32))
    _, outs = lax.scan(step, init, x)
    y = outs[-1] @ w_lab.T + b_lab
    logp = jax.nn.log_softmax(y, axis=-1)
    return y, outs, x, logp


if __name__ == "__main__":
    # Small shapes consistent with the module.
    seq_len, batch = 8, 2
    embedding_dim, hidden_dim = 16, 32
    vocab_size, label_size = 50, 4

    key = jax.random.PRNGKey(0)
    k_embd, k_ih, k_hh, k_bih, k_bhh, k_wl, k_bl, k_tok = jax.random.split(key, 8)

    # Deterministic synthetic parameters (shapes match nn.Embedding / nn.LSTM /
    # nn.Linear in LSTMBC.__init__).
    embd = jax.random.normal(k_embd, (vocab_size, embedding_dim), jnp.float32)
    scale = 1.0 / jnp.sqrt(hidden_dim)
    w_ih = jax.random.uniform(k_ih, (4 * hidden_dim, embedding_dim),
                              jnp.float32, -scale, scale)
    w_hh = jax.random.uniform(k_hh, (4 * hidden_dim, hidden_dim),
                              jnp.float32, -scale, scale)
    b_ih = jax.random.uniform(k_bih, (4 * hidden_dim,), jnp.float32, -scale, scale)
    b_hh = jax.random.uniform(k_bhh, (4 * hidden_dim,), jnp.float32, -scale, scale)
    w_lab = jax.random.uniform(k_wl, (label_size, hidden_dim),
                               jnp.float32, -scale, scale)
    b_lab = jax.random.uniform(k_bl, (label_size,), jnp.float32, -scale, scale)

    sentence = jax.random.randint(k_tok, (seq_len, batch), 0, vocab_size, jnp.int32)

    y, lstm_out, x, log_probs = jax.block_until_ready(
        lstm_bc_forward(sentence, embd, w_ih, w_hh, b_ih, b_hh, w_lab, b_lab))

    # Correctness check against a pure-JAX reference.
    y_r, out_r, x_r, lp_r = _reference_forward(
        sentence, embd, w_ih, w_hh, b_ih, b_hh, w_lab, b_lab)
    assert y.shape == (batch, label_size)
    assert lstm_out.shape == (seq_len, batch, hidden_dim)
    assert x.shape == (seq_len, batch, embedding_dim)
    assert log_probs.shape == (batch, label_size)
    assert jnp.allclose(x, x_r, atol=1e-5), "x mismatch"
    assert jnp.allclose(y, y_r, atol=1e-4), "y mismatch"
    assert jnp.allclose(lstm_out, out_r, atol=1e-4), "lstm_out mismatch"
    assert jnp.allclose(log_probs, lp_r, atol=1e-4), "log_probs mismatch"

    print("KERNEL_OK")
</pallas_src>

<mosaic_0001>
module attributes {stable_mosaic.version = 11 : i64} {
  func.func @_lstm_bc_kernel(%arg0: memref<16x1xi32, #tpu.memory_space<vmem>>, %arg1: memref<50x16xf32, #tpu.memory_space<vmem>>, %arg2: memref<16x128xf32, #tpu.memory_space<vmem>>, %arg3: memref<32x128xf32, #tpu.memory_space<vmem>>, %arg4: memref<1x128xf32, #tpu.memory_space<vmem>>, %arg5: memref<32x4xf32, #tpu.memory_space<vmem>>, %arg6: memref<1x4xf32, #tpu.memory_space<vmem>>, %arg7: memref<16x16xf32, #tpu.memory_space<vmem>>, %arg8: memref<2x256xf32, #tpu.memory_space<vmem>>, %arg9: memref<2x4xf32, #tpu.memory_space<vmem>>, %arg10: memref<2x4xf32, #tpu.memory_space<vmem>>) attributes {dimension_semantics = [], scalar_prefetch = 0 : i64, scratch_operands = 0 : i64, tpu.core_type = #tpu.core_type<tc>} {
    %c0 = arith.constant 0 : index
    %c0_0 = arith.constant 0 : index
    %0 = vector.load %arg0[%c0, %c0_0] : memref<16x1xi32, #tpu.memory_space<vmem>>, vector<16x1xi32>
    %1 = tpu.iota {dimensions = array<i32: 1>} : vector<16x50xi32>
    %2 = vector.broadcast %0 : vector<16x1xi32> to vector<16x50xi32>
    %3 = arith.cmpi eq, %2, %1 : vector<16x50xi32>
    %4 = arith.extui %3 : vector<16x50xi1> to vector<16x50xi32>
    %5 = arith.sitofp %4 : vector<16x50xi32> to vector<16x50xf32>
    %c0_1 = arith.constant 0 : index
    %c0_2 = arith.constant 0 : index
    %6 = vector.load %arg1[%c0_1, %c0_2] : memref<50x16xf32, #tpu.memory_space<vmem>>, vector<50x16xf32>
    %cst = arith.constant dense<0.000000e+00> : vector<16x16xf32>
    %7 = tpu.matmul %5, %6, %cst {dimension_numbers = #tpu.dot_dimension_numbers<[1], [0], [0], [1], [0, 0, 1, 1], [], []>} : vector<16x50xf32>, vector<50x16xf32>, vector<16x16xf32> -> vector<16x16xf32>
    %c0_3 = arith.constant 0 : index
    %c0_4 = arith.constant 0 : index
    %8 = vector.load %arg7[%c0_3, %c0_4] : memref<16x16xf32, #tpu.memory_space<vmem>>, vector<16x16xf32>
    tpu.vector_store %arg7[%c0_3, %c0_4], %7 {strides = array<i32>} : memref<16x16xf32, #tpu.memory_space<vmem>>, vector<16x16xf32>,
    %c0_5 = arith.constant 0 : index
    %c0_6 = arith.constant 0 : index
    %9 = vector.load %arg2[%c0_5, %c0_6] : memref<16x128xf32, #tpu.memory_space<vmem>>, vector<16x128xf32>
    %cst_7 = arith.constant dense<0.000000e+00> : vector<16x128xf32>
    %10 = tpu.matmul %7, %9, %cst_7 {dimension_numbers = #tpu.dot_dimension_numbers<[1], [0], [0], [1], [0, 0, 1, 1], [], []>} : vector<16x16xf32>, vector<16x128xf32>, vector<16x128xf32> -> vector<16x128xf32>
    %c0_8 = arith.constant 0 : index
    %c0_9 = arith.constant 0 : index
    %11 = vector.load %arg4[%c0_8, %c0_9] : memref<1x128xf32, #tpu.memory_space<vmem>>, vector<1x128xf32>
    %12 = vector.broadcast %11 : vector<1x128xf32> to vector<16x128xf32>
    %13 = arith.addf %10, %12 : vector<16x128xf32>
    %c0_10 = arith.constant 0 : index
    %c0_11 = arith.constant 0 : index
    %14 = vector.load %arg3[%c0_10, %c0_11] : memref<32x128xf32, #tpu.memory_space<vmem>>, vector<32x128xf32>
    %cst_12 = arith.constant 0.000000e+00 : f32
    %15 = vector.broadcast %cst_12 : f32 to vector<2x32xf32>
    %cst_13 = arith.constant 0.000000e+00 : f32
    %16 = vector.broadcast %cst_13 : f32 to vector<2x32xf32>
    %17 = vector.extract_strided_slice %13 {offsets = [0, 0], sizes = [2, 128], strides = [1, 1]} : vector<16x128xf32> to vector<2x128xf32>
    %cst_14 = arith.constant dense<0.000000e+00> : vector<2x128xf32>
    %18 = tpu.matmul %15, %14, %cst_14 {dimension_numbers = #tpu.dot_dimension_numbers<[1], [0], [0], [1], [0, 0, 1, 1], [], []>} : vector<2x32xf32>, vector<32x128xf32>, vector<2x128xf32> -> vector<2x128xf32>
    %19 = arith.addf %17, %18 : vector<2x128xf32>
    %20 = arith.negf %19 : vector<2x128xf32>
    %21 = math.exp %20 : vector<2x128xf32>
    %cst_15 = arith.constant 1.000000e+00 : f32
    %22 = vector.broadcast %cst_15 : f32 to vector<2x128xf32>
    %23 = arith.addf %22, %21 : vector<2x128xf32>
    %24 = arith.divf %22, %23 : vector<2x128xf32>
    %25 = math.tanh %19 : vector<2x128xf32>
    %26 = vector.extract_strided_slice %24 {offsets = [0, 0], sizes = [2, 32], strides = [1, 1]} : vector<2x128xf32> to vector<2x32xf32>
    %27 = vector.extract_strided_slice %24 {offsets = [0, 32], sizes = [2, 32], strides = [1, 1]} : vector<2x128xf32> to vector<2x32xf32>
    %28 = vector.extract_strided_slice %25 {offsets = [0, 64], sizes = [2, 32], strides = [1, 1]} : vector<2x128xf32> to vector<2x32xf32>
    %29 = vector.extract_strided_slice %24 {offsets = [0, 96], sizes = [2, 32], strides = [1, 1]} : vector<2x128xf32> to vector<2x32xf32>
    %30 = arith.mulf %27, %16 : vector<2x32xf32>
    %31 = arith.mulf %26, %28 : vector<2x32xf32>
    %32 = arith.addf %30, %31 : vector<2x32xf32>
    %33 = math.tanh %32 : vector<2x32xf32>
    %34 = arith.mulf %29, %33 : vector<2x32xf32>
    %35 = vector.extract_strided_slice %13 {offsets = [2, 0], sizes = [2, 128], strides = [1, 1]} : vector<16x128xf32> to vector<2x128xf32>
    %cst_16 = arith.constant dense<0.000000e+00> : vector<2x128xf32>
    %36 = tpu.matmul %34, %14, %cst_16 {dimension_numbers = #tpu.dot_dimension_numbers<[1], [0], [0], [1], [0, 0, 1, 1], [], []>} : vector<2x32xf32>, vector<32x128xf32>, vector<2x128xf32> -> vector<2x128xf32>
    %37 = arith.addf %35, %36 : vector<2x128xf32>
    %38 = arith.negf %37 : vector<2x128xf32>
    %39 = math.exp %38 : vector<2x128xf32>
    %cst_17 = arith.constant 1.000000e+00 : f32
    %40 = vector.broadcast %cst_17 : f32 to vector<2x128xf32>
    %41 = arith.addf %40, %39 : vector<2x128xf32>
    %42 = arith.divf %40, %41 : vector<2x128xf32>
    %43 = math.tanh %37 : vector<2x128xf32>
    %44 = vector.extract_strided_slice %42 {offsets = [0, 0], sizes = [2, 32], strides = [1, 1]} : vector<2x128xf32> to vector<2x32xf32>
    %45 = vector.extract_strided_slice %42 {offsets = [0, 32], sizes = [2, 32], strides = [1, 1]} : vector<2x128xf32> to vector<2x32xf32>
    %46 = vector.extract_strided_slice %43 {offsets = [0, 64], sizes = [2, 32], strides = [1, 1]} : vector<2x128xf32> to vector<2x32xf32>
    %47 = vector.extract_strided_slice %42 {offsets = [0, 96], sizes = [2, 32], strides = [1, 1]} : vector<2x128xf32> to vector<2x32xf32>
    %48 = arith.mulf %45, %32 : vector<2x32xf32>
    %49 = arith.mulf %44, %46 : vector<2x32xf32>
    %50 = arith.addf %48, %49 : vector<2x32xf32>
    %51 = math.tanh %50 : vector<2x32xf32>
    %52 = arith.mulf %47, %51 : vector<2x32xf32>
    %53 = vector.extract_strided_slice %13 {offsets = [4, 0], sizes = [2, 128], strides = [1, 1]} : vector<16x128xf32> to vector<2x128xf32>
    %cst_18 = arith.constant dense<0.000000e+00> : vector<2x128xf32>
    %54 = tpu.matmul %52, %14, %cst_18 {dimension_numbers = #tpu.dot_dimension_numbers<[1], [0], [0], [1], [0, 0, 1, 1], [], []>} : vector<2x32xf32>, vector<32x128xf32>, vector<2x128xf32> -> vector<2x128xf32>
    %55 = arith.addf %53, %54 : vector<2x128xf32>
    %56 = arith.negf %55 : vector<2x128xf32>
    %57 = math.exp %56 : vector<2x128xf32>
    %cst_19 = arith.constant 1.000000e+00 : f32
    %58 = vector.broadcast %cst_19 : f32 to vector<2x128xf32>
    %59 = arith.addf %58, %57 : vector<2x128xf32>
    %60 = arith.divf %58, %59 : vector<2x128xf32>
    %61 = math.tanh %55 : vector<2x128xf32>
    %62 = vector.extract_strided_slice %60 {offsets = [0, 0], sizes = [2, 32], strides = [1, 1]} : vector<2x128xf32> to vector<2x32xf32>
    %63 = vector.extract_strided_slice %60 {offsets = [0, 32], sizes = [2, 32], strides = [1, 1]} : vector<2x128xf32> to vector<2x32xf32>
    %64 = vector.extract_strided_slice %61 {offsets = [0, 64], sizes = [2, 32], strides = [1, 1]} : vector<2x128xf32> to vector<2x32xf32>
    %65 = vector.extract_strided_slice %60 {offsets = [0, 96], sizes = [2, 32], strides = [1, 1]} : vector<2x128xf32> to vector<2x32xf32>
    %66 = arith.mulf %63, %50 : vector<2x32xf32>
    %67 = arith.mulf %62, %64 : vector<2x32xf32>
    %68 = arith.addf %66, %67 : vector<2x32xf32>
    %69 = math.tanh %68 : vector<2x32xf32>
    %70 = arith.mulf %65, %69 : vector<2x32xf32>
    %71 = vector.extract_strided_slice %13 {offsets = [6, 0], sizes = [2, 128], strides = [1, 1]} : vector<16x128xf32> to vector<2x128xf32>
    %cst_20 = arith.constant dense<0.000000e+00> : vector<2x128xf32>
    %72 = tpu.matmul %70, %14, %cst_20 {dimension_numbers = #tpu.dot_dimension_numbers<[1], [0], [0], [1], [0, 0, 1, 1], [], []>} : vector<2x32xf32>, vector<32x128xf32>, vector<2x128xf32> -> vector<2x128xf32>
    %73 = arith.addf %71, %72 : vector<2x128xf32>
    %74 = arith.negf %73 : vector<2x128xf32>
    %75 = math.exp %74 : vector<2x128xf32>
    %cst_21 = arith.constant 1.000000e+00 : f32
    %76 = vector.broadcast %cst_21 : f32 to vector<2x128xf32>
    %77 = arith.addf %76, %75 : vector<2x128xf32>
    %78 = arith.divf %76, %77 : vector<2x128xf32>
    %79 = math.tanh %73 : vector<2x128xf32>
    %80 = vector.extract_strided_slice %78 {offsets = [0, 0], sizes = [2, 32], strides = [1, 1]} : vector<2x128xf32> to vector<2x32xf32>
    %81 = vector.extract_strided_slice %78 {offsets = [0, 32], sizes = [2, 32], strides = [1, 1]} : vector<2x128xf32> to vector<2x32xf32>
    %82 = vector.extract_strided_slice %79 {offsets = [0, 64], sizes = [2, 32], strides = [1, 1]} : vector<2x128xf32> to vector<2x32xf32>
    %83 = vector.extract_strided_slice %78 {offsets = [0, 96], sizes = [2, 32], strides = [1, 1]} : vector<2x128xf32> to vector<2x32xf32>
    %84 = arith.mulf %81, %68 : vector<2x32xf32>
    %85 = arith.mulf %80, %82 : vector<2x32xf32>
    %86 = arith.addf %84, %85 : vector<2x32xf32>
    %87 = math.tanh %86 : vector<2x32xf32>
    %88 = arith.mulf %83, %87 : vector<2x32xf32>
    %89 = vector.extract_strided_slice %13 {offsets = [8, 0], sizes = [2, 128], strides = [1, 1]} : vector<16x128xf32> to vector<2x128xf32>
    %cst_22 = arith.constant dense<0.000000e+00> : vector<2x128xf32>
    %90 = tpu.matmul %88, %14, %cst_22 {dimension_numbers = #tpu.dot_dimension_numbers<[1], [0], [0], [1], [0, 0, 1, 1], [], []>} : vector<2x32xf32>, vector<32x128xf32>, vector<2x128xf32> -> vector<2x128xf32>
    %91 = arith.addf %89, %90 : vector<2x128xf32>
    %92 = arith.negf %91 : vector<2x128xf32>
    %93 = math.exp %92 : vector<2x128xf32>
    %cst_23 = arith.constant 1.000000e+00 : f32
    %94 = vector.broadcast %cst_23 : f32 to vector<2x128xf32>
    %95 = arith.addf %94, %93 : vector<2x128xf32>
    %96 = arith.divf %94, %95 : vector<2x128xf32>
    %97 = math.tanh %91 : vector<2x128xf32>
    %98 = vector.extract_strided_slice %96 {offsets = [0, 0], sizes = [2, 32], strides = [1, 1]} : vector<2x128xf32> to vector<2x32xf32>
    %99 = vector.extract_strided_slice %96 {offsets = [0, 32], sizes = [2, 32], strides = [1, 1]} : vector<2x128xf32> to vector<2x32xf32>
    %100 = vector.extract_strided_slice %97 {offsets = [0, 64], sizes = [2, 32], strides = [1, 1]} : vector<2x128xf32> to vector<2x32xf32>
    %101 = vector.extract_strided_slice %96 {offsets = [0, 96], sizes = [2, 32], strides = [1, 1]} : vector<2x128xf32> to vector<2x32xf32>
    %102 = arith.mulf %99, %86 : vector<2x32xf32>
    %103 = arith.mulf %98, %100 : vector<2x32xf32>
    %104 = arith.addf %102, %103 : vector<2x32xf32>
    %105 = math.tanh %104 : vector<2x32xf32>
    %106 = arith.mulf %101, %105 : vector<2x32xf32>
    %107 = vector.extract_strided_slice %13 {offsets = [10, 0], sizes = [2, 128], strides = [1, 1]} : vector<16x128xf32> to vector<2x128xf32>
    %cst_24 = arith.constant dense<0.000000e+00> : vector<2x128xf32>
    %108 = tpu.matmul %106, %14, %cst_24 {dimension_numbers = #tpu.dot_dimension_numbers<[1], [0], [0], [1], [0, 0, 1, 1], [], []>} : vector<2x32xf32>, vector<32x128xf32>, vector<2x128xf32> -> vector<2x128xf32>
    %109 = arith.addf %107, %108 : vector<2x128xf32>
    %110 = arith.negf %109 : vector<2x128xf32>
    %111 = math.exp %110 : vector<2x128xf32>
    %cst_25 = arith.constant 1.000000e+00 : f32
    %112 = vector.broadcast %cst_25 : f32 to vector<2x128xf32>
    %113 = arith.addf %112, %111 : vector<2x128xf32>
    %114 = arith.divf %112, %113 : vector<2x128xf32>
    %115 = math.tanh %109 : vector<2x128xf32>
    %116 = vector.extract_strided_slice %114 {offsets = [0, 0], sizes = [2, 32], strides = [1, 1]} : vector<2x128xf32> to vector<2x32xf32>
    %117 = vector.extract_strided_slice %114 {offsets = [0, 32], sizes = [2, 32], strides = [1, 1]} : vector<2x128xf32> to vector<2x32xf32>
    %118 = vector.extract_strided_slice %115 {offsets = [0, 64], sizes = [2, 32], strides = [1, 1]} : vector<2x128xf32> to vector<2x32xf32>
    %119 = vector.extract_strided_slice %114 {offsets = [0, 96], sizes = [2, 32], strides = [1, 1]} : vector<2x128xf32> to vector<2x32xf32>
    %120 = arith.mulf %117, %104 : vector<2x32xf32>
    %121 = arith.mulf %116, %118 : vector<2x32xf32>
    %122 = arith.addf %120, %121 : vector<2x32xf32>
    %123 = math.tanh %122 : vector<2x32xf32>
    %124 = arith.mulf %119, %123 : vector<2x32xf32>
    %125 = vector.extract_strided_slice %13 {offsets = [12, 0], sizes = [2, 128], strides = [1, 1]} : vector<16x128xf32> to vector<2x128xf32>
    %cst_26 = arith.constant dense<0.000000e+00> : vector<2x128xf32>
    %126 = tpu.matmul %124, %14, %cst_26 {dimension_numbers = #tpu.dot_dimension_numbers<[1], [0], [0], [1], [0, 0, 1, 1], [], []>} : vector<2x32xf32>, vector<32x128xf32>, vector<2x128xf32> -> vector<2x128xf32>
    %127 = arith.addf %125, %126 : vector<2x128xf32>
    %128 = arith.negf %127 : vector<2x128xf32>
    %129 = math.exp %128 : vector<2x128xf32>
    %cst_27 = arith.constant 1.000000e+00 : f32
    %130 = vector.broadcast %cst_27 : f32 to vector<2x128xf32>
    %131 = arith.addf %130, %129 : vector<2x128xf32>
    %132 = arith.divf %130, %131 : vector<2x128xf32>
    %133 = math.tanh %127 : vector<2x128xf32>
    %134 = vector.extract_strided_slice %132 {offsets = [0, 0], sizes = [2, 32], strides = [1, 1]} : vector<2x128xf32> to vector<2x32xf32>
    %135 = vector.extract_strided_slice %132 {offsets = [0, 32], sizes = [2, 32], strides = [1, 1]} : vector<2x128xf32> to vector<2x32xf32>
    %136 = vector.extract_strided_slice %133 {offsets = [0, 64], sizes = [2, 32], strides = [1, 1]} : vector<2x128xf32> to vector<2x32xf32>
    %137 = vector.extract_strided_slice %132 {offsets = [0, 96], sizes = [2, 32], strides = [1, 1]} : vector<2x128xf32> to vector<2x32xf32>
    %138 = arith.mulf %135, %122 : vector<2x32xf32>
    %139 = arith.mulf %134, %136 : vector<2x32xf32>
    %140 = arith.addf %138, %139 : vector<2x32xf32>
    %141 = math.tanh %140 : vector<2x32xf32>
    %142 = arith.mulf %137, %141 : vector<2x32xf32>
    %143 = vector.extract_strided_slice %13 {offsets = [14, 0], sizes = [2, 128], strides = [1, 1]} : vector<16x128xf32> to vector<2x128xf32>
    %cst_28 = arith.constant dense<0.000000e+00> : vector<2x128xf32>
    %144 = tpu.matmul %142, %14, %cst_28 {dimension_numbers = #tpu.dot_dimension_numbers<[1], [0], [0], [1], [0, 0, 1, 1], [], []>} : vector<2x32xf32>, vector<32x128xf32>, vector<2x128xf32> -> vector<2x128xf32>
    %145 = arith.addf %143, %144 : vector<2x128xf32>
    %146 = arith.negf %145 : vector<2x128xf32>
    %147 = math.exp %146 : vector<2x128xf32>
    %cst_29 = arith.constant 1.000000e+00 : f32
    %148 = vector.broadcast %cst_29 : f32 to vector<2x128xf32>
    %149 = arith.addf %148, %147 : vector<2x128xf32>
    %150 = arith.divf %148, %149 : vector<2x128xf32>
    %151 = math.tanh %145 : vector<2x128xf32>
    %152 = vector.extract_strided_slice %150 {offsets = [0, 0], sizes = [2, 32], strides = [1, 1]} : vector<2x128xf32> to vector<2x32xf32>
    %153 = vector.extract_strided_slice %150 {offsets = [0, 32], sizes = [2, 32], strides = [1, 1]} : vector<2x128xf32> to vector<2x32xf32>
    %154 = vector.extract_strided_slice %151 {offsets = [0, 64], sizes = [2, 32], strides = [1, 1]} : vector<2x128xf32> to vector<2x32xf32>
    %155 = vector.extract_strided_slice %150 {offsets = [0, 96], sizes = [2, 32], strides = [1, 1]} : vector<2x128xf32> to vector<2x32xf32>
    %156 = arith.mulf %153, %140 : vector<2x32xf32>
    %157 = arith.mulf %152, %154 : vector<2x32xf32>
    %158 = arith.addf %156, %157 : vector<2x32xf32>
    %159 = math.tanh %158 : vector<2x32xf32>
    %160 = arith.mulf %155, %159 : vector<2x32xf32>
    %161 = tpu.concatenate %34, %52, %70, %88, %106, %124, %142, %160 in 1 : vector<2x32xf32>, vector<2x32xf32>, vector<2x32xf32>, vector<2x32xf32>, vector<2x32xf32>, vector<2x32xf32>, vector<2x32xf32>, vector<2x32xf32> -> vector<2x256xf32>
    %c0_30 = arith.constant 0 : index
    %c0_31 = arith.constant 0 : index
    %162 = vector.load %arg8[%c0_30, %c0_31] : memref<2x256xf32, #tpu.memory_space<vmem>>, vector<2x256xf32>
    tpu.vector_store %arg8[%c0_30, %c0_31], %161 {strides = array<i32>} : memref<2x256xf32, #tpu.memory_space<vmem>>, vector<2x256xf32>,
    %c0_32 = arith.constant 0 : index
    %c0_33 = arith.constant 0 : index
    %163 = vector.load %arg5[%c0_32, %c0_33] : memref<32x4xf32, #tpu.memory_space<vmem>>, vector<32x4xf32>
    %cst_34 = arith.constant dense<0.000000e+00> : vector<2x4xf32>
    %164 = tpu.matmul %160, %163, %cst_34 {dimension_numbers = #tpu.dot_dimension_numbers<[1], [0], [0], [1], [0, 0, 1, 1], [], []>} : vector<2x32xf32>, vector<32x4xf32>, vector<2x4xf32> -> vector<2x4xf32>
    %c0_35 = arith.constant 0 : index
    %c0_36 = arith.constant 0 : index
    %165 = vector.load %arg6[%c0_35, %c0_36] : memref<1x4xf32, #tpu.memory_space<vmem>>, vector<1x4xf32>
    %166 = vector.broadcast %165 : vector<1x4xf32> to vector<2x4xf32>
    %167 = arith.addf %164, %166 : vector<2x4xf32>
    %c0_37 = arith.constant 0 : index
    %c0_38 = arith.constant 0 : index
    %168 = vector.load %arg9[%c0_37, %c0_38] : memref<2x4xf32, #tpu.memory_space<vmem>>, vector<2x4xf32>
    tpu.vector_store %arg9[%c0_37, %c0_38], %167 {strides = array<i32>} : memref<2x4xf32, #tpu.memory_space<vmem>>, vector<2x4xf32>,
    %cst_39 = arith.constant dense<0xFF800000> : vector<2xf32>
    %169 = vector.multi_reduction <maximumf>, %167, %cst_39 [1] : vector<2x4xf32> to vector<2xf32>
    %170 = vector.shape_cast %169 : vector<2xf32> to vector<2x1xf32>
    %171 = vector.broadcast %170 : vector<2x1xf32> to vector<2x4xf32>
    %172 = arith.subf %167, %171 : vector<2x4xf32>
    %173 = math.exp %172 : vector<2x4xf32>
    %cst_40 = arith.constant dense<0.000000e+00> : vector<2xf32>
    %174 = vector.multi_reduction <add>, %173, %cst_40 [1] : vector<2x4xf32> to vector<2xf32>
    %175 = vector.shape_cast %174 : vector<2xf32> to vector<2x1xf32>
    %176 = math.log %175 : vector<2x1xf32>
    %177 = arith.addf %176, %170 : vector<2x1xf32>
    %178 = vector.broadcast %177 : vector<2x1xf32> to vector<2x4xf32>
    %179 = arith.subf %167, %178 : vector<2x4xf32>
    %c0_41 = arith.constant 0 : index
    %c0_42 = arith.constant 0 : index
    %180 = vector.load %arg10[%c0_41, %c0_42] : memref<2x4xf32, #tpu.memory_space<vmem>>, vector<2x4xf32>
    tpu.vector_store %arg10[%c0_41, %c0_42], %179 {strides = array<i32>} : memref<2x4xf32, #tpu.memory_space<vmem>>, vector<2x4xf32>,
    return
  }
}

</mosaic_0001>

<llo_original>
// kernel: lstm_bc_forward.1
$region0: #{lstm_bc_forward.1}
  #allocation0 [shape = 'u32[]', space=smem, size = 0x4, offset = 0x4, fixed_abs, tag = 'smem constant byte address 0x4 - core index']
  #allocation1 [shape = 'u32[144,128]{1,0:T(1,128)}', space=vmem, size = 0x12000, scoped, tag = 'internal scratch']
  %s0 = inlined_call_operand.vmem [shape: s32[16,1], index: 0, kind: input, shape index: {}]
  %s1 = inlined_call_operand.vmem [shape: f32[50,16], index: 1, kind: input, shape index: {}]
  %s2 = inlined_call_operand.vmem [shape: f32[16,128], index: 2, kind: input, shape index: {}]
  %s3 = inlined_call_operand.vmem [shape: f32[32,128], index: 3, kind: input, shape index: {}]
  %s4 = inlined_call_operand.vmem [shape: f32[1,128], index: 4, kind: input, shape index: {}]
  %s5 = inlined_call_operand.vmem [shape: f32[32,4], index: 5, kind: input, shape index: {}]
  %s6 = inlined_call_operand.vmem [shape: f32[1,4], index: 6, kind: input, shape index: {}]
  %s7 = inlined_call_operand.hbm [shape: f32[16,16], index: 7, kind: output, shape index: {0}]
  %s8 = inlined_call_operand.vmem [shape: f32[2,256], index: 8, kind: output, shape index: {1}]
  %s9 = inlined_call_operand.hbm [shape: f32[2,4], index: 9, kind: output, shape index: {2}]
  %s10 = inlined_call_operand.hbm [shape: f32[2,4], index: 10, kind: output, shape index: {3}]
  %11 = xla_tuple %s7, %s8, %s9, %s10
  %s12 = sld [smem:[#allocation0]]
  $region62: #{lstm_bc_forward.1} parent=0
    _
  %s14 = ssub.s32 1, %s12
  %s15 = scalar_select 0, %s14, %s12
  $region1: #{lstm_bc_forward.1} parent=0
    #allocation2 [shape = 'u8[8192]{0}', space=vmem, size = 0x2000, scoped, tag = 'output window, operand 0, single buffered']
    #allocation3 [shape = 's32[1]{0}', space=sflag, size = 0x4, scoped, tag = 'scoped memory for lstm_bc_forward.1']
    #allocation4 [shape = 'u8[1024]{0}', space=vmem, size = 0x400, scoped, tag = 'output window, operand 2, single buffered']
    #allocation5 [shape = 's32[1]{0}', space=sflag, size = 0x4, scoped, tag = 'scoped memory for lstm_bc_forward.1']
    #allocation6 [shape = 'u8[1024]{0}', space=vmem, size = 0x400, scoped, tag = 'output window, operand 3, single buffered']
    %16 = vsyncpa [#allocation3], 0
    %17 = vsyncpa [#allocation5], 0
    // Predicated region
    $region2: #{lstm_bc_forward.1} parent=1 // pred_check
      _
    $region3: #{lstm_bc_forward.1} parent=1 // pred_check_branch
      %19 = sbr.rel (0) target = $region5
    $region4: #{lstm_bc_forward.1} parent=1 // pred_region
      _
    $region5: #{lstm_bc_forward.1} parent=1 // pred_fallthru
      _
    // Predicated region
    $region6: #{lstm_bc_forward.1} parent=1 // pred_check
      _
    $region7: #{lstm_bc_forward.1} parent=1 // pred_check_branch
      %21 = sbr.rel (0) target = $region9
    $region8: #{lstm_bc_forward.1} parent=1 // pred_region
      _
    $region9: #{lstm_bc_forward.1} parent=1 // pred_fallthru
      _
    // Predicated region
    $region10: #{lstm_bc_forward.1} parent=1 // pred_check
      _
    $region11: #{lstm_bc_forward.1} parent=1 // pred_check_branch
      %23 = sbr.rel (0) target = $region13
    $region12: #{lstm_bc_forward.1} parent=1 // pred_region
      _
    $region13: #{lstm_bc_forward.1} parent=1 // pred_fallthru
      _
    // Predicated region
    $region14: #{lstm_bc_forward.1} parent=1 // pred_check
      _
    $region15: #{lstm_bc_forward.1} parent=1 // pred_check_branch
      %25 = sbr.rel (0) target = $region17
    $region16: #{lstm_bc_forward.1} parent=1 // pred_region
      _
    $region17: #{lstm_bc_forward.1} parent=1 // pred_fallthru
      _
    // Predicated region
    $region18: #{lstm_bc_forward.1} parent=1 // pred_check
      _
    $region19: #{lstm_bc_forward.1} parent=1 // pred_check_branch
      %27 = sbr.rel (0) target = $region21
    $region20: #{lstm_bc_forward.1} parent=1 // pred_region
      _
    $region21: #{lstm_bc_forward.1} parent=1 // pred_fallthru
      _
    // Predicated region
    $region22: #{lstm_bc_forward.1} parent=1 // pred_check
      _
    $region23: #{lstm_bc_forward.1} parent=1 // pred_check_branch
      %29 = sbr.rel (0) target = $region25
    $region24: #{lstm_bc_forward.1} parent=1 // pred_region
      _
    $region25: #{lstm_bc_forward.1} parent=1 // pred_fallthru
      _
    // Predicated region
    $region26: #{lstm_bc_forward.1} parent=1 // pred_check
      _
    $region27: #{lstm_bc_forward.1} parent=1 // pred_check_branch
      %31 = sbr.rel (0) target = $region29
    $region28: #{lstm_bc_forward.1} parent=1 // pred_region
      _
    $region29: #{lstm_bc_forward.1} parent=1 // pred_fallthru
      _
    %v32 = vld [vmem:[%s0] sm:$0xff]
    %v33 = vld [vmem:[%s0 + $0x8] sm:$0xff]
    %v34 = vlaneseq
    %v35 = vand.u32 %v34, 127
    %36 = vset.pattern.permute.xlu0 0
    %37 = vperm.xlu0 %36, %v32
    %v38 = vpop.permute.xlu0 %37
    %39 = vset.pattern.permute.xlu0 0
    %40 = vperm.xlu0 %39, %v33
    %v41 = vpop.permute.xlu0 %40
    %vm42 = vcmp.eq.s32.totalorder %v38, %v35
    %vm43 = vcmp.eq.s32.totalorder %v41, %v35
    %v44 = vsel %vm42, 1, 0
    %v45 = vsel %vm43, 1, 0
    %v46 = vcvt.s32.f32 %v44
    %v47 = vcvt.s32.f32 %v45
    %v48 = vld [vmem:[%s1] sm:$0xff]
    %v49 = vld [vmem:[%s1 + $0x8] sm:$0xff]
    %v50 = vld [vmem:[%s1 + $0x10] sm:$0xff]
    %v51 = vld [vmem:[%s1 + $0x18] sm:$0xff]
    %v52 = vld [vmem:[%s1 + $0x20] sm:$0xff]
    %v53 = vld [vmem:[%s1 + $0x28] sm:$0xff]
    %v54 = vld [vmem:[%s1 + $0x30] sm:$0x3]
    %vm55 = vcmask 408576
    %v57 = vsel %vm55, %v46, 0
    %v60 = vsel %vm55, %v47, 0
    %vm62 = vcmask 1041408
    %v64 = vsel %vm62, %v54, 0
    %66 = vmatprep.subr.mxu0 0.0
    %67 = vmatpush1.msra.mxu0 %v48
    %68 = vmatprep.subr.mxu0 0.0
    %69 = vmatpush1.msra.mxu0 %v49
    %70 = vmatprep.subr.mxu0 0.0
    %71 = vmatpush1.msra.mxu0 %v50
    %72 = vmatprep.subr.mxu0 0.0
    %73 = vmatpush1.msra.mxu0 %v51
    %74 = vmatprep.subr.mxu0 0.0
    %75 = vmatpush1.msra.mxu0 %v52
    %76 = vmatprep.subr.mxu0 0.0
    %77 = vmatpush1.msra.mxu0 %v53
    %78 = vmatprep.subr.mxu0 0.0
    %79 = vmatpush1.msra.mxu0 %v64
    %80 = vmatprep.subr.mxu0 0.0
    %81 = vmatpush1.msra.mxu0 0.0
    %82 = vmatprep.subr.mxu0 0.0
    %83 = vmatpush1.msra.mxu0 0.0
    %84 = vmatprep.subr.mxu0 0.0
    %85 = vmatpush1.msra.mxu0 0.0
    %86 = vmatprep.subr.mxu0 0.0
    %87 = vmatpush1.msra.mxu0 0.0
    %88 = vmatprep.subr.mxu0 0.0
    %89 = vmatpush1.msra.mxu0 0.0
    %90 = vmatprep.subr.mxu0 0.0
    %91 = vmatpush1.msra.mxu0 0.0
    %92 = vmatprep.subr.mxu0 0.0
    %93 = vmatpush1.msra.mxu0 0.0
    %94 = vmatprep.subr.mxu0 0.0
    %95 = vmatpush1.msra.mxu0 0.0
    %96 = vmatprep.subr.mxu0 0.0
    %97 = vmatpush1.msra.mxu0 0.0
    %98 = vmatprep.subr.mxu0 0.0
    %99 = vmatpush1.msra.mxu0 0.0
    %100 = vmatprep.subr.mxu0 0.0
    %101 = vmatpush1.msra.mxu0 0.0
    %102 = vmatprep.subr.mxu0 0.0
    %103 = vmatpush1.msra.mxu0 0.0
    %104 = vmatprep.subr.mxu0 0.0
    %105 = vmatpush1.msra.mxu0 0.0
    %106 = vmatprep.subr.mxu0 0.0
    %107 = vmatpush1.msra.mxu0 0.0
    %108 = vmatprep.subr.mxu0 0.0
    %109 = vmatpush1.msra.mxu0 0.0
    %110 = vmatprep.subr.mxu0 0.0
    %111 = vmatpush1.msra.mxu0 0.0
    %112 = vmatprep.subr.mxu0 0.0
    %113 = vmatpush1.msra.mxu0 0.0
    %114 = vmatprep.subr.mxu0 0.0
    %115 = vmatpush1.msra.mxu0 0.0
    %116 = vmatprep.subr.mxu0 0.0
    %117 = vmatpush1.msra.mxu0 0.0
    %118 = vmatprep.subr.mxu0 0.0
    %119 = vmatpush1.msra.mxu0 0.0
    %120 = vmatprep.subr.mxu0 0.0
    %121 = vmatpush1.msra.mxu0 0.0
    %122 = vmatprep.subr.mxu0 0.0
    %123 = vmatpush1.msra.mxu0 0.0
    %124 = vmatprep.subr.mxu0 0.0
    %125 = vmatpush1.msra.mxu0 0.0
    %126 = vmatprep.subr.mxu0 0.0
    %127 = vmatpush1.msra.mxu0 0.0
    %128 = vmatprep.subr.mxu0 0.0
    %129 = vmatpush1.msra.mxu0 0.0
    %130 = vmatprep.mubr.f32.mxu0 0.0
    %131 = vmatmul.mubr.f32.gmra.mrb[0].mxu0 %v57
    %v132 = vpop.f32.mrb[0].mxu0
    %v133 = vadd.f32 0.0, %v132
    %v134 = vpop.f32.mrb[0].mxu0
    %135 = vmatprep.mubr.f32.mxu0 0.0
    %136 = vmatmul.mubr.f32.gmra.mrb[0].mxu0 %v60
    %v137 = vpop.f32.mrb[0].mxu0
    %v138 = vadd.f32 0.0, %v137
    %v139 = vpop.f32.mrb[0].mxu0
    %140 = vdwg.mxu0
    %vm141 = vcmask 130048
    %142 = vst.msk [vmem:[#allocation2] sm:$0xff] %vm141, %v133
    %143 = vst.msk [vmem:[#allocation2 + $0x8] sm:$0xff] %vm141, %v138
    %v144 = vld [vmem:[%s2] sm:$0xff]
    %v145 = vld [vmem:[%s2 + $0x8] sm:$0xff]
    %v146 = vld [vmem:[%s4] sm:$0x1]
    %v148 = vlaneseq
    %v149 = vshrl.u32 %v148, 7
    %v150 = vsub.s32 0, %v149
    %v151 = vrot.slane %v146, %v150
    %v154 = vsel %vm141, %v133, 0
    %v157 = vsel %vm141, %v138, 0
    %159 = vmatprep.subr.mxu0 0.0
    %160 = vmatpush1.msra.mxu0 %v144
    %161 = vmatprep.subr.mxu0 0.0
    %162 = vmatpush1.msra.mxu0 %v145
    %163 = vmatprep.subr.mxu0 0.0
    %164 = vmatpush1.msra.mxu0 0.0
    %165 = vmatprep.subr.mxu0 0.0
    %166 = vmatpush1.msra.mxu0 0.0
    %167 = vmatprep.subr.mxu0 0.0
    %168 = vmatpush1.msra.mxu0 0.0
    %169 = vmatprep.subr.mxu0 0.0
    %170 = vmatpush1.msra.mxu0 0.0
    %171 = vmatprep.subr.mxu0 0.0
    %172 = vmatpush1.msra.mxu0 0.0
    %173 = vmatprep.subr.mxu0 0.0
    %174 = vmatpush1.msra.mxu0 0.0
    %175 = vmatprep.subr.mxu0 0.0
    %176 = vmatpush1.msra.mxu0 0.0
    %177 = vmatprep.subr.mxu0 0.0
    %178 = vmatpush1.msra.mxu0 0.0
    %179 = vmatprep.subr.mxu0 0.0
    %180 = vmatpush1.msra.mxu0 0.0
    %181 = vmatprep.subr.mxu0 0.0
    %182 = vmatpush1.msra.mxu0 0.0
    %183 = vmatprep.subr.mxu0 0.0
    %184 = vmatpush1.msra.mxu0 0.0
    %185 = vmatprep.subr.mxu0 0.0
    %186 = vmatpush1.msra.mxu0 0.0
    %187 = vmatprep.subr.mxu0 0.0
    %188 = vmatpush1.msra.mxu0 0.0
    %189 = vmatprep.subr.mxu0 0.0
    %190 = vmatpush1.msra.mxu0 0.0
    %191 = vmatprep.subr.mxu0 0.0
    %192 = vmatpush1.msra.mxu0 0.0
    %193 = vmatprep.subr.mxu0 0.0
    %194 = vmatpush1.msra.mxu0 0.0
    %195 = vmatprep.subr.mxu0 0.0
    %196 = vmatpush1.msra.mxu0 0.0
    %197 = vmatprep.subr.mxu0 0.0
    %198 = vmatpush1.msra.mxu0 0.0
    %199 = vmatprep.subr.mxu0 0.0
    %200 = vmatpush1.msra.mxu0 0.0
    %201 = vmatprep.subr.mxu0 0.0
    %202 = vmatpush1.msra.mxu0 0.0
    %203 = vmatprep.subr.mxu0 0.0
    %204 = vmatpush1.msra.mxu0 0.0
    %205 = vmatprep.subr.mxu0 0.0
    %206 = vmatpush1.msra.mxu0 0.0
    %207 = vmatprep.subr.mxu0 0.0
    %208 = vmatpush1.msra.mxu0 0.0
    %209 = vmatprep.subr.mxu0 0.0
    %210 = vmatpush1.msra.mxu0 0.0
    %211 = vmatprep.subr.mxu0 0.0
    %212 = vmatpush1.msra.mxu0 0.0
    %213 = vmatprep.subr.mxu0 0.0
    %214 = vmatpush1.msra.mxu0 0.0
    %215 = vmatprep.subr.mxu0 0.0
    %216 = vmatpush1.msra.mxu0 0.0
    %217 = vmatprep.subr.mxu0 0.0
    %218 = vmatpush1.msra.mxu0 0.0
    %219 = vmatprep.subr.mxu0 0.0
    %220 = vmatpush1.msra.mxu0 0.0
    %221 = vmatprep.subr.mxu0 0.0
    %222 = vmatpush1.msra.mxu0 0.0
    %223 = vmatprep.mubr.f32.mxu0 0.0
    %224 = vmatmul.mubr.f32.gmra.mrb[0].mxu0 %v154
    %v225 = vpop.f32.mrb[0].mxu0
    %v226 = vadd.f32 %v151, %v225
    %v227 = vpop.f32.mrb[0].mxu0
    %228 = vmatprep.mubr.f32.mxu0 0.0
    %229 = vmatmul.mubr.f32.gmra.mrb[0].mxu0 %v157
    %v230 = vpop.f32.mrb[0].mxu0
    %v231 = vadd.f32 %v151, %v230
    %v232 = vpop.f32.mrb[0].mxu0
    %233 = vdwg.mxu0
    %v234 = vld [vmem:[%s3] sm:$0xff]
    %v235 = vld [vmem:[%s3 + $0x8] sm:$0xff]
    %v236 = vld [vmem:[%s3 + $0x10] sm:$0xff]
    %v237 = vld [vmem:[%s3 + $0x18] sm:$0xff]
    %vm238 = vcmask 261120
    %v240 = vsel %vm238, 0.0, 0
    %242 = vmatprep.subr.mxu0 0.0
    %243 = vmatpush1.msra.mxu0 %v234
    %244 = vmatprep.subr.mxu0 0.0
    %245 = vmatpush1.msra.mxu0 %v235
    %246 = vmatprep.subr.mxu0 0.0
    %247 = vmatpush1.msra.mxu0 %v236
    %248 = vmatprep.subr.mxu0 0.0
    %249 = vmatpush1.msra.mxu0 %v237
    %250 = vmatprep.subr.mxu0 0.0
    %251 = vmatpush1.msra.mxu0 0.0
    %252 = vmatprep.subr.mxu0 0.0
    %253 = vmatpush1.msra.mxu0 0.0
    %254 = vmatprep.subr.mxu0 0.0
    %255 = vmatpush1.msra.mxu0 0.0
    %256 = vmatprep.subr.mxu0 0.0
    %257 = vmatpush1.msra.mxu0 0.0
    %258 = vmatprep.subr.mxu0 0.0
    %259 = vmatpush1.msra.mxu0 0.0
    %260 = vmatprep.subr.mxu0 0.0
    %261 = vmatpush1.msra.mxu0 0.0
    %262 = vmatprep.subr.mxu0 0.0
    %263 = vmatpush1.msra.mxu0 0.0
    %264 = vmatprep.subr.mxu0 0.0
    %265 = vmatpush1.msra.mxu0 0.0
    %266 = vmatprep.subr.mxu0 0.0
    %267 = vmatpush1.msra.mxu0 0.0
    %268 = vmatprep.subr.mxu0 0.0
    %269 = vmatpush1.msra.mxu0 0.0
    %270 = vmatprep.subr.mxu0 0.0
    %271 = vmatpush1.msra.mxu0 0.0
    %272 = vmatprep.subr.mxu0 0.0
    %273 = vmatpush1.msra.mxu0 0.0
    %274 = vmatprep.subr.mxu0 0.0
    %275 = vmatpush1.msra.mxu0 0.0
    %276 = vmatprep.subr.mxu0 0.0
    %277 = vmatpush1.msra.mxu0 0.0
    %278 = vmatprep.subr.mxu0 0.0
    %279 = vmatpush1.msra.mxu0 0.0
    %280 = vmatprep.subr.mxu0 0.0
    %281 = vmatpush1.msra.mxu0 0.0
    %282 = vmatprep.subr.mxu0 0.0
    %283 = vmatpush1.msra.mxu0 0.0
    %284 = vmatprep.subr.mxu0 0.0
    %285 = vmatpush1.msra.mxu0 0.0
    %286 = vmatprep.subr.mxu0 0.0
    %287 = vmatpush1.msra.mxu0 0.0
    %288 = vmatprep.subr.mxu0 0.0
    %289 = vmatpush1.msra.mxu0 0.0
    %290 = vmatprep.subr.mxu0 0.0
    %291 = vmatpush1.msra.mxu0 0.0
    %292 = vmatprep.subr.mxu0 0.0
    %293 = vmatpush1.msra.mxu0 0.0
    %294 = vmatprep.subr.mxu0 0.0
    %295 = vmatpush1.msra.mxu0 0.0
    %296 = vmatprep.subr.mxu0 0.0
    %297 = vmatpush1.msra.mxu0 0.0
    %298 = vmatprep.subr.mxu0 0.0
    %299 = vmatpush1.msra.mxu0 0.0
    %300 = vmatprep.subr.mxu0 0.0
    %301 = vmatpush1.msra.mxu0 0.0
    %302 = vmatprep.subr.mxu0 0.0
    %303 = vmatpush1.msra.mxu0 0.0
    %304 = vmatprep.subr.mxu0 0.0
    %305 = vmatpush1.msra.mxu0 0.0
    %306 = vmatprep.mubr.f32.mxu0 0.0
    %307 = vmatmul.mubr.f32.gmra.mrb[0].mxu0 %v240
    %v308 = vpop.f32.mrb[0].mxu0
    %v309 = vadd.f32 0.0, %v308
    %v310 = vpop.f32.mrb[0].mxu0
    %311 = vdwg.mxu0
    %v312 = vadd.f32 %v226, %v309
    %v313 = vxor.u32 %v312, 2147483648
    %v314 = vmul.f32 %v313, 1.442695
    %v315 = vpow.pop %v314
    %v316 = vadd.f32 %v315, 1.0
    %v317 = vrcp.pop %v316
    %v318 = vmul.f32 1.0, %v317
    %v319 = vtanh.pop %v312
    %v320 = vmul.f32 %v318, 0.0
    %322 = vrot.lane.b32.xlu0 %v319, 64
    %v323 = vpop.permute.xlu0 %322
    %v325 = vmul.f32 %v318, %v323
    %327 = vrot.lane.b32.xlu0 %v325, 32
    %v328 = vpop.permute.xlu0 %327
    %v330 = vadd.f32 %v320, %v328
    %v331 = vtanh.pop %v330
    %333 = vrot.lane.b32.xlu0 %v331, 64
    %v334 = vpop.permute.xlu0 %333
    %v336 = vmul.f32 %v318, %v334
    %338 = vrot.lane.b32.xlu0 %v336, 32
    %v339 = vpop.permute.xlu0 %338
    %v340 = vsel %vm238, %v339, 0
    %342 = vmatprep.subr.mxu0 0.0
    %343 = vmatpush1.msra.mxu0 %v234
    %344 = vmatprep.subr.mxu0 0.0
    %345 = vmatpush1.msra.mxu0 %v235
    %346 = vmatprep.subr.mxu0 0.0
    %347 = vmatpush1.msra.mxu0 %v236
    %348 = vmatprep.subr.mxu0 0.0
    %349 = vmatpush1.msra.mxu0 %v237
    %350 = vmatprep.subr.mxu0 0.0
    %351 = vmatpush1.msra.mxu0 0.0
    %352 = vmatprep.subr.mxu0 0.0
    %353 = vmatpush1.msra.mxu0 0.0
    %354 = vmatprep.subr.mxu0 0.0
    %355 = vmatpush1.msra.mxu0 0.0
    %356 = vmatprep.subr.mxu0 0.0
    %357 = vmatpush1.msra.mxu0 0.0
    %358 = vmatprep.subr.mxu0 0.0
    %359 = vmatpush1.msra.mxu0 0.0
    %360 = vmatprep.subr.mxu0 0.0
    %361 = vmatpush1.msra.mxu0 0.0
    %362 = vmatprep.subr.mxu0 0.0
    %363 = vmatpush1.msra.mxu0 0.0
    %364 = vmatprep.subr.mxu0 0.0
    %365 = vmatpush1.msra.mxu0 0.0
    %366 = vmatprep.subr.mxu0 0.0
    %367 = vmatpush1.msra.mxu0 0.0
    %368 = vmatprep.subr.mxu0 0.0
    %369 = vmatpush1.msra.mxu0 0.0
    %370 = vmatprep.subr.mxu0 0.0
    %371 = vmatpush1.msra.mxu0 0.0
    %372 = vmatprep.subr.mxu0 0.0
    %373 = vmatpush1.msra.mxu0 0.0
    %374 = vmatprep.subr.mxu0 0.0
    %375 = vmatpush1.msra.mxu0 0.0
    %376 = vmatprep.subr.mxu0 0.0
    %377 = vmatpush1.msra.mxu0 0.0
    %378 = vmatprep.subr.mxu0 0.0
    %379 = vmatpush1.msra.mxu0 0.0
    %380 = vmatprep.subr.mxu0 0.0
    %381 = vmatpush1.msra.mxu0 0.0
    %382 = vmatprep.subr.mxu0 0.0
    %383 = vmatpush1.msra.mxu0 0.0
    %384 = vmatprep.subr.mxu0 0.0
    %385 = vmatpush1.msra.mxu0 0.0
    %386 = vmatprep.subr.mxu0 0.0
    %387 = vmatpush1.msra.mxu0 0.0
    %388 = vmatprep.subr.mxu0 0.0
    %389 = vmatpush1.msra.mxu0 0.0
    %390 = vmatprep.subr.mxu0 0.0
    %391 = vmatpush1.msra.mxu0 0.0
    %392 = vmatprep.subr.mxu0 0.0
    %393 = vmatpush1.msra.mxu0 0.0
    %394 = vmatprep.subr.mxu0 0.0
    %395 = vmatpush1.msra.mxu0 0.0
    %396 = vmatprep.subr.mxu0 0.0
    %397 = vmatpush1.msra.mxu0 0.0
    %398 = vmatprep.subr.mxu0 0.0
    %399 = vmatpush1.msra.mxu0 0.0
    %400 = vmatprep.subr.mxu0 0.0
    %401 = vmatpush1.msra.mxu0 0.0
    %402 = vmatprep.subr.mxu0 0.0
    %403 = vmatpush1.msra.mxu0 0.0
    %404 = vmatprep.subr.mxu0 0.0
    %405 = vmatpush1.msra.mxu0 0.0
    %406 = vmatprep.mubr.f32.mxu0 0.0
    %407 = vmatmul.mubr.f32.gmra.mrb[0].mxu0 %v340
    %v408 = vpop.f32.mrb[0].mxu0
    %v409 = vadd.f32 0.0, %v408
    %v410 = vpop.f32.mrb[0].mxu0
    %411 = vdwg.mxu0
    %v413 = vrot.slane %v409, 6
    %v415 = vadd.f32 %v226, %v413
    %v416 = vxor.u32 %v415, 2147483648
    %v417 = vmul.f32 %v416, 1.442695
    %v418 = vpow.pop %v417
    %v419 = vadd.f32 %v418, 1.0
    %v420 = vrcp.pop %v419
    %v421 = vmul.f32 1.0, %v420
    %v422 = vtanh.pop %v415
    %v424 = vrot.slane %v330, 6
    %v426 = vmul.f32 %v421, %v424
    %428 = vrot.lane.b32.xlu0 %v422, 64
    %v429 = vpop.permute.xlu0 %428
    %v431 = vmul.f32 %v421, %v429
    %433 = vrot.lane.b32.xlu0 %v431, 32
    %v434 = vpop.permute.xlu0 %433
    %v436 = vadd.f32 %v426, %v434
    %v437 = vtanh.pop %v436
    %439 = vrot.lane.b32.xlu0 %v437, 64
    %v440 = vpop.permute.xlu0 %439
    %v442 = vmul.f32 %v421, %v440
    %v444 = vrot.slane %v442, 2
    %445 = vrot.lane.b32.xlu0 %v444, 32
    %v446 = vpop.permute.xlu0 %445
    %v447 = vsel %vm238, %v446, 0
    %449 = vmatprep.subr.mxu0 0.0
    %450 = vmatpush1.msra.mxu0 %v234
    %451 = vmatprep.subr.mxu0 0.0
    %452 = vmatpush1.msra.mxu0 %v235
    %453 = vmatprep.subr.mxu0 0.0
    %454 = vmatpush1.msra.mxu0 %v236
    %455 = vmatprep.subr.mxu0 0.0
    %456 = vmatpush1.msra.mxu0 %v237
    %457 = vmatprep.subr.mxu0 0.0
    %458 = vmatpush1.msra.mxu0 0.0
    %459 = vmatprep.subr.mxu0 0.0
    %460 = vmatpush1.msra.mxu0 0.0
    %461 = vmatprep.subr.mxu0 0.0
    %462 = vmatpush1.msra.mxu0 0.0
    %463 = vmatprep.subr.mxu0 0.0
    %464 = vmatpush1.msra.mxu0 0.0
    %465 = vmatprep.subr.mxu0 0.0
    %466 = vmatpush1.msra.mxu0 0.0
    %467 = vmatprep.subr.mxu0 0.0
    %468 = vmatpush1.msra.mxu0 0.0
    %469 = vmatprep.subr.mxu0 0.0
    %470 = vmatpush1.msra.mxu0 0.0
    %471 = vmatprep.subr.mxu0 0.0
    %472 = vmatpush1.msra.mxu0 0.0
    %473 = vmatprep.subr.mxu0 0.0
    %474 = vmatpush1.msra.mxu0 0.0
    %475 = vmatprep.subr.mxu0 0.0
    %476 = vmatpush1.msra.mxu0 0.0
    %477 = vmatprep.subr.mxu0 0.0
    %478 = vmatpush1.msra.mxu0 0.0
    %479 = vmatprep.subr.mxu0 0.0
    %480 = vmatpush1.msra.mxu0 0.0
    %481 = vmatprep.subr.mxu0 0.0
    %482 = vmatpush1.msra.mxu0 0.0
    %483 = vmatprep.subr.mxu0 0.0
    %484 = vmatpush1.msra.mxu0 0.0
    %485 = vmatprep.subr.mxu0 0.0
    %486 = vmatpush1.msra.mxu0 0.0
    %487 = vmatprep.subr.mxu0 0.0
    %488 = vmatpush1.msra.mxu0 0.0
    %489 = vmatprep.subr.mxu0 0.0
    %490 = vmatpush1.msra.mxu0 0.0
    %491 = vmatprep.subr.mxu0 0.0
    %492 = vmatpush1.msra.mxu0 0.0
    %493 = vmatprep.subr.mxu0 0.0
    %494 = vmatpush1.msra.mxu0 0.0
    %495 = vmatprep.subr.mxu0 0.0
    %496 = vmatpush1.msra.mxu0 0.0
    %497 = vmatprep.subr.mxu0 0.0
    %498 = vmatpush1.msra.mxu0 0.0
    %499 = vmatprep.subr.mxu0 0.0
    %500 = vmatpush1.msra.mxu0 0.0
    %501 = vmatprep.subr.mxu0 0.0
    %502 = vmatpush1.msra.mxu0 0.0
    %503 = vmatprep.subr.mxu0 0.0
    %504 = vmatpush1.msra.mxu0 0.0
    %505 = vmatprep.subr.mxu0 0.0
    %506 = vmatpush1.msra.mxu0 0.0
    %507 = vmatprep.subr.mxu0 0.0
    %508 = vmatpush1.msra.mxu0 0.0
    %509 = vmatprep.subr.mxu0 0.0
    %510 = vmatpush1.msra.mxu0 0.0
    %511 = vmatprep.subr.mxu0 0.0
    %512 = vmatpush1.msra.mxu0 0.0
    %513 = vmatprep.mubr.f32.mxu0 0.0
    %514 = vmatmul.mubr.f32.gmra.mrb[0].mxu0 %v447
    %v515 = vpop.f32.mrb[0].mxu0
    %v516 = vadd.f32 0.0, %v515
    %v517 = vpop.f32.mrb[0].mxu0
    %518 = vdwg.mxu0
    %v520 = vrot.slane %v516, 4
    %v522 = vadd.f32 %v226, %v520
    %v523 = vxor.u32 %v522, 2147483648
    %v524 = vmul.f32 %v523, 1.442695
    %v525 = vpow.pop %v524
    %v526 = vadd.f32 %v525, 1.0
    %v527 = vrcp.pop %v526
    %v528 = vmul.f32 1.0, %v527
    %v529 = vtanh.pop %v522
    %v531 = vrot.slane %v436, 6
    %v533 = vmul.f32 %v528, %v531
    %535 = vrot.lane.b32.xlu0 %v529, 64
    %v536 = vpop.permute.xlu0 %535
    %v538 = vmul.f32 %v528, %v536
    %540 = vrot.lane.b32.xlu0 %v538, 32
    %v541 = vpop.permute.xlu0 %540
    %v543 = vadd.f32 %v533, %v541
    %v544 = vtanh.pop %v543
    %546 = vrot.lane.b32.xlu0 %v544, 64
    %v547 = vpop.permute.xlu0 %546
    %v549 = vmul.f32 %v528, %v547
    %v551 = vrot.slane %v549, 4
    %552 = vrot.lane.b32.xlu0 %v551, 32
    %v553 = vpop.permute.xlu0 %552
    %v554 = vsel %vm238, %v553, 0
    %556 = vmatprep.subr.mxu0 0.0
    %557 = vmatpush1.msra.mxu0 %v234
    %558 = vmatprep.subr.mxu0 0.0
    %559 = vmatpush1.msra.mxu0 %v235
    %560 = vmatprep.subr.mxu0 0.0
    %561 = vmatpush1.msra.mxu0 %v236
    %562 = vmatprep.subr.mxu0 0.0
    %563 = vmatpush1.msra.mxu0 %v237
    %564 = vmatprep.subr.mxu0 0.0
    %565 = vmatpush1.msra.mxu0 0.0
    %566 = vmatprep.subr.mxu0 0.0
    %567 = vmatpush1.msra.mxu0 0.0
    %568 = vmatprep.subr.mxu0 0.0
    %569 = vmatpush1.msra.mxu0 0.0
    %570 = vmatprep.subr.mxu0 0.0
    %571 = vmatpush1.msra.mxu0 0.0
    %572 = vmatprep.subr.mxu0 0.0
    %573 = vmatpush1.msra.mxu0 0.0
    %574 = vmatprep.subr.mxu0 0.0
    %575 = vmatpush1.msra.mxu0 0.0
    %576 = vmatprep.subr.mxu0 0.0
    %577 = vmatpush1.msra.mxu0 0.0
    %578 = vmatprep.subr.mxu0 0.0
    %579 = vmatpush1.msra.mxu0 0.0
    %580 = vmatprep.subr.mxu0 0.0
    %581 = vmatpush1.msra.mxu0 0.0
    %582 = vmatprep.subr.mxu0 0.0
    %583 = vmatpush1.msra.mxu0 0.0
    %584 = vmatprep.subr.mxu0 0.0
    %585 = vmatpush1.msra.mxu0 0.0
    %586 = vmatprep.subr.mxu0 0.0
    %587 = vmatpush1.msra.mxu0 0.0
    %588 = vmatprep.subr.mxu0 0.0
    %589 = vmatpush1.msra.mxu0 0.0
    %590 = vmatprep.subr.mxu0 0.0
    %591 = vmatpush1.msra.mxu0 0.0
    %592 = vmatprep.subr.mxu0 0.0
    %593 = vmatpush1.msra.mxu0 0.0
    %594 = vmatprep.subr.mxu0 0.0
    %595 = vmatpush1.msra.mxu0 0.0
    %596 = vmatprep.subr.mxu0 0.0
    %597 = vmatpush1.msra.mxu0 0.0
    %598 = vmatprep.subr.mxu0 0.0
    %599 = vmatpush1.msra.mxu0 0.0
    %600 = vmatprep.subr.mxu0 0.0
    %601 = vmatpush1.msra.mxu0 0.0
    %602 = vmatprep.subr.mxu0 0.0
    %603 = vmatpush1.msra.mxu0 0.0
    %604 = vmatprep.subr.mxu0 0.0
    %605 = vmatpush1.msra.mxu0 0.0
    %606 = vmatprep.subr.mxu0 0.0
    %607 = vmatpush1.msra.mxu0 0.0
    %608 = vmatprep.subr.mxu0 0.0
    %609 = vmatpush1.msra.mxu0 0.0
    %610 = vmatprep.subr.mxu0 0.0
    %611 = vmatpush1.msra.mxu0 0.0
    %612 = vmatprep.subr.mxu0 0.0
    %613 = vmatpush1.msra.mxu0 0.0
    %614 = vmatprep.subr.mxu0 0.0
    %615 = vmatpush1.msra.mxu0 0.0
    %616 = vmatprep.subr.mxu0 0.0
    %617 = vmatpush1.msra.mxu0 0.0
    %618 = vmatprep.subr.mxu0 0.0
    %619 = vmatpush1.msra.mxu0 0.0
    %620 = vmatprep.mubr.f32.mxu0 0.0
    %621 = vmatmul.mubr.f32.gmra.mrb[0].mxu0 %v554
    %v622 = vpop.f32.mrb[0].mxu0
    %v623 = vadd.f32 0.0, %v622
    %v624 = vpop.f32.mrb[0].mxu0
    %625 = vdwg.mxu0
    %v627 = vrot.slane %v623, 2
    %v629 = vadd.f32 %v226, %v627
    %v630 = vxor.u32 %v629, 2147483648
    %v631 = vmul.f32 %v630, 1.442695
    %v632 = vpow.pop %v631
    %v633 = vadd.f32 %v632, 1.0
    %v634 = vrcp.pop %v633
    %v635 = vmul.f32 1.0, %v634
    %v636 = vtanh.pop %v629
    %v638 = vrot.slane %v543, 6
    %v640 = vmul.f32 %v635, %v638
    %642 = vrot.lane.b32.xlu0 %v636, 64
    %v643 = vpop.permute.xlu0 %642
    %v645 = vmul.f32 %v635, %v643
    %647 = vrot.lane.b32.xlu0 %v645, 32
    %v648 = vpop.permute.xlu0 %647
    %v650 = vadd.f32 %v640, %v648
    %v651 = vtanh.pop %v650
    %653 = vrot.lane.b32.xlu0 %v651, 64
    %v654 = vpop.permute.xlu0 %653
    %v656 = vmul.f32 %v635, %v654
    %v658 = vrot.slane %v656, 6
    %659 = vrot.lane.b32.xlu0 %v658, 32
    %v660 = vpop.permute.xlu0 %659
    %v661 = vsel %vm238, %v660, 0
    %663 = vmatprep.subr.mxu0 0.0
    %664 = vmatpush1.msra.mxu0 %v234
    %665 = vmatprep.subr.mxu0 0.0
    %666 = vmatpush1.msra.mxu0 %v235
    %667 = vmatprep.subr.mxu0 0.0
    %668 = vmatpush1.msra.mxu0 %v236
    %669 = vmatprep.subr.mxu0 0.0
    %670 = vmatpush1.msra.mxu0 %v237
    %671 = vmatprep.subr.mxu0 0.0
    %672 = vmatpush1.msra.mxu0 0.0
    %673 = vmatprep.subr.mxu0 0.0
    %674 = vmatpush1.msra.mxu0 0.0
    %675 = vmatprep.subr.mxu0 0.0
    %676 = vmatpush1.msra.mxu0 0.0
    %677 = vmatprep.subr.mxu0 0.0
    %678 = vmatpush1.msra.mxu0 0.0
    %679 = vmatprep.subr.mxu0 0.0
    %680 = vmatpush1.msra.mxu0 0.0
    %681 = vmatprep.subr.mxu0 0.0
    %682 = vmatpush1.msra.mxu0 0.0
    %683 = vmatprep.subr.mxu0 0.0
    %684 = vmatpush1.msra.mxu0 0.0
    %685 = vmatprep.subr.mxu0 0.0
    %686 = vmatpush1.msra.mxu0 0.0
    %687 = vmatprep.subr.mxu0 0.0
    %688 = vmatpush1.msra.mxu0 0.0
    %689 = vmatprep.subr.mxu0 0.0
    %690 = vmatpush1.msra.mxu0 0.0
    %691 = vmatprep.subr.mxu0 0.0
    %692 = vmatpush1.msra.mxu0 0.0
    %693 = vmatprep.subr.mxu0 0.0
    %694 = vmatpush1.msra.mxu0 0.0
    %695 = vmatprep.subr.mxu0 0.0
    %696 = vmatpush1.msra.mxu0 0.0
    %697 = vmatprep.subr.mxu0 0.0
    %698 = vmatpush1.msra.mxu0 0.0
    %699 = vmatprep.subr.mxu0 0.0
    %700 = vmatpush1.msra.mxu0 0.0
    %701 = vmatprep.subr.mxu0 0.0
    %702 = vmatpush1.msra.mxu0 0.0
    %703 = vmatprep.subr.mxu0 0.0
    %704 = vmatpush1.msra.mxu0 0.0
    %705 = vmatprep.subr.mxu0 0.0
    %706 = vmatpush1.msra.mxu0 0.0
    %707 = vmatprep.subr.mxu0 0.0
    %708 = vmatpush1.msra.mxu0 0.0
    %709 = vmatprep.subr.mxu0 0.0
    %710 = vmatpush1.msra.mxu0 0.0
    %711 = vmatprep.subr.mxu0 0.0
    %712 = vmatpush1.msra.mxu0 0.0
    %713 = vmatprep.subr.mxu0 0.0
    %714 = vmatpush1.msra.mxu0 0.0
    %715 = vmatprep.subr.mxu0 0.0
    %716 = vmatpush1.msra.mxu0 0.0
    %717 = vmatprep.subr.mxu0 0.0
    %718 = vmatpush1.msra.mxu0 0.0
    %719 = vmatprep.subr.mxu0 0.0
    %720 = vmatpush1.msra.mxu0 0.0
    %721 = vmatprep.subr.mxu0 0.0
    %722 = vmatpush1.msra.mxu0 0.0
    %723 = vmatprep.subr.mxu0 0.0
    %724 = vmatpush1.msra.mxu0 0.0
    %725 = vmatprep.subr.mxu0 0.0
    %726 = vmatpush1.msra.mxu0 0.0
    %727 = vmatprep.mubr.f32.mxu0 0.0
    %728 = vmatmul.mubr.f32.gmra.mrb[0].mxu0 %v661
    %v729 = vpop.f32.mrb[0].mxu0
    %v730 = vadd.f32 0.0, %v729
    %v731 = vpop.f32.mrb[0].mxu0
    %732 = vdwg.mxu0
    %v733 = vadd.f32 %v231, %v730
    %v734 = vxor.u32 %v733, 2147483648
    %v735 = vmul.f32 %v734, 1.442695
    %v736 = vpow.pop %v735
    %v737 = vadd.f32 %v736, 1.0
    %v738 = vrcp.pop %v737
    %v739 = vmul.f32 1.0, %v738
    %v740 = vtanh.pop %v733
    %v742 = vrot.slane %v650, 6
    %v744 = vmul.f32 %v739, %v742
    %746 = vrot.lane.b32.xlu0 %v740, 64
    %v747 = vpop.permute.xlu0 %746
    %v749 = vmul.f32 %v739, %v747
    %751 = vrot.lane.b32.xlu0 %v749, 32
    %v752 = vpop.permute.xlu0 %751
    %v754 = vadd.f32 %v744, %v752
    %v755 = vtanh.pop %v754
    %757 = vrot.lane.b32.xlu0 %v755, 64
    %v758 = vpop.permute.xlu0 %757
    %v760 = vmul.f32 %v739, %v758
    %762 = vrot.lane.b32.xlu0 %v760, 32
    %v763 = vpop.permute.xlu0 %762
    %v764 = vsel %vm238, %v763, 0
    %766 = vmatprep.subr.mxu0 0.0
    %767 = vmatpush1.msra.mxu0 %v234
    %768 = vmatprep.subr.mxu0 0.0
    %769 = vmatpush1.msra.mxu0 %v235
    %770 = vmatprep.subr.mxu0 0.0
    %771 = vmatpush1.msra.mxu0 %v236
    %772 = vmatprep.subr.mxu0 0.0
    %773 = vmatpush1.msra.mxu0 %v237
    %774 = vmatprep.subr.mxu0 0.0
    %775 = vmatpush1.msra.mxu0 0.0
    %776 = vmatprep.subr.mxu0 0.0
    %777 = vmatpush1.msra.mxu0 0.0
    %778 = vmatprep.subr.mxu0 0.0
    %779 = vmatpush1.msra.mxu0 0.0
    %780 = vmatprep.subr.mxu0 0.0
    %781 = vmatpush1.msra.mxu0 0.0
    %782 = vmatprep.subr.mxu0 0.0
    %783 = vmatpush1.msra.mxu0 0.0
    %784 = vmatprep.subr.mxu0 0.0
    %785 = vmatpush1.msra.mxu0 0.0
    %786 = vmatprep.subr.mxu0 0.0
    %787 = vmatpush1.msra.mxu0 0.0
    %788 = vmatprep.subr.mxu0 0.0
    %789 = vmatpush1.msra.mxu0 0.0
    %790 = vmatprep.subr.mxu0 0.0
    %791 = vmatpush1.msra.mxu0 0.0
    %792 = vmatprep.subr.mxu0 0.0
    %793 = vmatpush1.msra.mxu0 0.0
    %794 = vmatprep.subr.mxu0 0.0
    %795 = vmatpush1.msra.mxu0 0.0
    %796 = vmatprep.subr.mxu0 0.0
    %797 = vmatpush1.msra.mxu0 0.0
    %798 = vmatprep.subr.mxu0 0.0
    %799 = vmatpush1.msra.mxu0 0.0
    %800 = vmatprep.subr.mxu0 0.0
    %801 = vmatpush1.msra.mxu0 0.0
    %802 = vmatprep.subr.mxu0 0.0
    %803 = vmatpush1.msra.mxu0 0.0
    %804 = vmatprep.subr.mxu0 0.0
    %805 = vmatpush1.msra.mxu0 0.0
    %806 = vmatprep.subr.mxu0 0.0
    %807 = vmatpush1.msra.mxu0 0.0
    %808 = vmatprep.subr.mxu0 0.0
    %809 = vmatpush1.msra.mxu0 0.0
    %810 = vmatprep.subr.mxu0 0.0
    %811 = vmatpush1.msra.mxu0 0.0
    %812 = vmatprep.subr.mxu0 0.0
    %813 = vmatpush1.msra.mxu0 0.0
    %814 = vmatprep.subr.mxu0 0.0
    %815 = vmatpush1.msra.mxu0 0.0
    %816 = vmatprep.subr.mxu0 0.0
    %817 = vmatpush1.msra.mxu0 0.0
    %818 = vmatprep.subr.mxu0 0.0
    %819 = vmatpush1.msra.mxu0 0.0
    %820 = vmatprep.subr.mxu0 0.0
    %821 = vmatpush1.msra.mxu0 0.0
    %822 = vmatprep.subr.mxu0 0.0
    %823 = vmatpush1.msra.mxu0 0.0
    %824 = vmatprep.subr.mxu0 0.0
    %825 = vmatpush1.msra.mxu0 0.0
    %826 = vmatprep.subr.mxu0 0.0
    %827 = vmatpush1.msra.mxu0 0.0
    %828 = vmatprep.subr.mxu0 0.0
    %829 = vmatpush1.msra.mxu0 0.0
    %830 = vmatprep.mubr.f32.mxu0 0.0
    %831 = vmatmul.mubr.f32.gmra.mrb[0].mxu0 %v764
    %v832 = vpop.f32.mrb[0].mxu0
    %v833 = vadd.f32 0.0, %v832
    %v834 = vpop.f32.mrb[0].mxu0
    %835 = vdwg.mxu0
    %v837 = vrot.slane %v833, 6
    %v839 = vadd.f32 %v231, %v837
    %v840 = vxor.u32 %v839, 2147483648
    %v841 = vmul.f32 %v840, 1.442695
    %v842 = vpow.pop %v841
    %v843 = vadd.f32 %v842, 1.0
    %v844 = vrcp.pop %v843
    %v845 = vmul.f32 1.0, %v844
    %v846 = vtanh.pop %v839
    %v848 = vrot.slane %v754, 6
    %v850 = vmul.f32 %v845, %v848
    %852 = vrot.lane.b32.xlu0 %v846, 64
    %v853 = vpop.permute.xlu0 %852
    %v855 = vmul.f32 %v845, %v853
    %857 = vrot.lane.b32.xlu0 %v855, 32
    %v858 = vpop.permute.xlu0 %857
    %v860 = vadd.f32 %v850, %v858
    %v861 = vtanh.pop %v860
    %863 = vrot.lane.b32.xlu0 %v861, 64
    %v864 = vpop.permute.xlu0 %863
    %v866 = vmul.f32 %v845, %v864
    %v868 = vrot.slane %v866, 2
    %869 = vrot.lane.b32.xlu0 %v868, 32
    %v870 = vpop.permute.xlu0 %869
    %v871 = vsel %vm238, %v870, 0
    %873 = vmatprep.subr.mxu0 0.0
    %874 = vmatpush1.msra.mxu0 %v234
    %875 = vmatprep.subr.mxu0 0.0
    %876 = vmatpush1.msra.mxu0 %v235
    %877 = vmatprep.subr.mxu0 0.0
    %878 = vmatpush1.msra.mxu0 %v236
    %879 = vmatprep.subr.mxu0 0.0
    %880 = vmatpush1.msra.mxu0 %v237
    %881 = vmatprep.subr.mxu0 0.0
    %882 = vmatpush1.msra.mxu0 0.0
    %883 = vmatprep.subr.mxu0 0.0
    %884 = vmatpush1.msra.mxu0 0.0
    %885 = vmatprep.subr.mxu0 0.0
    %886 = vmatpush1.msra.mxu0 0.0
    %887 = vmatprep.subr.mxu0 0.0
    %888 = vmatpush1.msra.mxu0 0.0
    %889 = vmatprep.subr.mxu0 0.0
    %890 = vmatpush1.msra.mxu0 0.0
    %891 = vmatprep.subr.mxu0 0.0
    %892 = vmatpush1.msra.mxu0 0.0
    %893 = vmatprep.subr.mxu0 0.0
    %894 = vmatpush1.msra.mxu0 0.0
    %895 = vmatprep.subr.mxu0 0.0
    %896 = vmatpush1.msra.mxu0 0.0
    %897 = vmatprep.subr.mxu0 0.0
    %898 = vmatpush1.msra.mxu0 0.0
    %899 = vmatprep.subr.mxu0 0.0
    %900 = vmatpush1.msra.mxu0 0.0
    %901 = vmatprep.subr.mxu0 0.0
    %902 = vmatpush1.msra.mxu0 0.0
    %903 = vmatprep.subr.mxu0 0.0
    %904 = vmatpush1.msra.mxu0 0.0
    %905 = vmatprep.subr.mxu0 0.0
    %906 = vmatpush1.msra.mxu0 0.0
    %907 = vmatprep.subr.mxu0 0.0
    %908 = vmatpush1.msra.mxu0 0.0
    %909 = vmatprep.subr.mxu0 0.0
    %910 = vmatpush1.msra.mxu0 0.0
    %911 = vmatprep.subr.mxu0 0.0
    %912 = vmatpush1.msra.mxu0 0.0
    %913 = vmatprep.subr.mxu0 0.0
    %914 = vmatpush1.msra.mxu0 0.0
    %915 = vmatprep.subr.mxu0 0.0
    %916 = vmatpush1.msra.mxu0 0.0
    %917 = vmatprep.subr.mxu0 0.0
    %918 = vmatpush1.msra.mxu0 0.0
    %919 = vmatprep.subr.mxu0 0.0
    %920 = vmatpush1.msra.mxu0 0.0
    %921 = vmatprep.subr.mxu0 0.0
    %922 = vmatpush1.msra.mxu0 0.0
    %923 = vmatprep.subr.mxu0 0.0
    %924 = vmatpush1.msra.mxu0 0.0
    %925 = vmatprep.subr.mxu0 0.0
    %926 = vmatpush1.msra.mxu0 0.0
    %927 = vmatprep.subr.mxu0 0.0
    %928 = vmatpush1.msra.mxu0 0.0
    %929 = vmatprep.subr.mxu0 0.0
    %930 = vmatpush1.msra.mxu0 0.0
    %931 = vmatprep.subr.mxu0 0.0
    %932 = vmatpush1.msra.mxu0 0.0
    %933 = vmatprep.subr.mxu0 0.0
    %934 = vmatpush1.msra.mxu0 0.0
    %935 = vmatprep.subr.mxu0 0.0
    %936 = vmatpush1.msra.mxu0 0.0
    %937 = vmatprep.mubr.f32.mxu0 0.0
    %938 = vmatmul.mubr.f32.gmra.mrb[0].mxu0 %v871
    %v939 = vpop.f32.mrb[0].mxu0
    %v940 = vadd.f32 0.0, %v939
    %v941 = vpop.f32.mrb[0].mxu0
    %942 = vdwg.mxu0
    %v944 = vrot.slane %v940, 4
    %v946 = vadd.f32 %v231, %v944
    %v947 = vxor.u32 %v946, 2147483648
    %v948 = vmul.f32 %v947, 1.442695
    %v949 = vpow.pop %v948
    %v950 = vadd.f32 %v949, 1.0
    %v951 = vrcp.pop %v950
    %v952 = vmul.f32 1.0, %v951
    %v953 = vtanh.pop %v946
    %v955 = vrot.slane %v860, 6
    %v957 = vmul.f32 %v952, %v955
    %959 = vrot.lane.b32.xlu0 %v953, 64
    %v960 = vpop.permute.xlu0 %959
    %v962 = vmul.f32 %v952, %v960
    %964 = vrot.lane.b32.xlu0 %v962, 32
    %v965 = vpop.permute.xlu0 %964
    %v967 = vadd.f32 %v957, %v965
    %v968 = vtanh.pop %v967
    %970 = vrot.lane.b32.xlu0 %v968, 64
    %v971 = vpop.permute.xlu0 %970
    %v973 = vmul.f32 %v952, %v971
    %v975 = vrot.slane %v973, 4
    %976 = vrot.lane.b32.xlu0 %v975, 32
    %v977 = vpop.permute.xlu0 %976
    %v978 = vsel %vm238, %v977, 0
    %980 = vmatprep.subr.mxu0 0.0
    %981 = vmatpush1.msra.mxu0 %v234
    %982 = vmatprep.subr.mxu0 0.0
    %983 = vmatpush1.msra.mxu0 %v235
    %984 = vmatprep.subr.mxu0 0.0
    %985 = vmatpush1.msra.mxu0 %v236
    %986 = vmatprep.subr.mxu0 0.0
    %987 = vmatpush1.msra.mxu0 %v237
    %988 = vmatprep.subr.mxu0 0.0
    %989 = vmatpush1.msra.mxu0 0.0
    %990 = vmatprep.subr.mxu0 0.0
    %991 = vmatpush1.msra.mxu0 0.0
    %992 = vmatprep.subr.mxu0 0.0
    %993 = vmatpush1.msra.mxu0 0.0
    %994 = vmatprep.subr.mxu0 0.0
    %995 = vmatpush1.msra.mxu0 0.0
    %996 = vmatprep.subr.mxu0 0.0
    %997 = vmatpush1.msra.mxu0 0.0
    %998 = vmatprep.subr.mxu0 0.0
    %999 = vmatpush1.msra.mxu0 0.0
    %1000 = vmatprep.subr.mxu0 0.0
    %1001 = vmatpush1.msra.mxu0 0.0
    %1002 = vmatprep.subr.mxu0 0.0
    %1003 = vmatpush1.msra.mxu0 0.0
    %1004 = vmatprep.subr.mxu0 0.0
    %1005 = vmatpush1.msra.mxu0 0.0
    %1006 = vmatprep.subr.mxu0 0.0
    %1007 = vmatpush1.msra.mxu0 0.0
    %1008 = vmatprep.subr.mxu0 0.0
    %1009 = vmatpush1.msra.mxu0 0.0
    %1010 = vmatprep.subr.mxu0 0.0
    %1011 = vmatpush1.msra.mxu0 0.0
    %1012 = vmatprep.subr.mxu0 0.0
    %1013 = vmatpush1.msra.mxu0 0.0
    %1014 = vmatprep.subr.mxu0 0.0
    %1015 = vmatpush1.msra.mxu0 0.0
    %1016 = vmatprep.subr.mxu0 0.0
    %1017 = vmatpush1.msra.mxu0 0.0
    %1018 = vmatprep.subr.mxu0 0.0
    %1019 = vmatpush1.msra.mxu0 0.0
    %1020 = vmatprep.subr.mxu0 0.0
    %1021 = vmatpush1.msra.mxu0 0.0
    %1022 = vmatprep.subr.mxu0 0.0
    %1023 = vmatpush1.msra.mxu0 0.0
    %1024 = vmatprep.subr.mxu0 0.0
    %1025 = vmatpush1.msra.mxu0 0.0
    %1026 = vmatprep.subr.mxu0 0.0
    %1027 = vmatpush1.msra.mxu0 0.0
    %1028 = vmatprep.subr.mxu0 0.0
    %1029 = vmatpush1.msra.mxu0 0.0
    %1030 = vmatprep.subr.mxu0 0.0
    %1031 = vmatpush1.msra.mxu0 0.0
    %1032 = vmatprep.subr.mxu0 0.0
    %1033 = vmatpush1.msra.mxu0 0.0
    %1034 = vmatprep.subr.mxu0 0.0
    %1035 = vmatpush1.msra.mxu0 0.0
    %1036 = vmatprep.subr.mxu0 0.0
    %1037 = vmatpush1.msra.mxu0 0.0
    %1038 = vmatprep.subr.mxu0 0.0
    %1039 = vmatpush1.msra.mxu0 0.0
    %1040 = vmatprep.subr.mxu0 0.0
    %1041 = vmatpush1.msra.mxu0 0.0
    %1042 = vmatprep.subr.mxu0 0.0
    %1043 = vmatpush1.msra.mxu0 0.0
    %1044 = vmatprep.mubr.f32.mxu0 0.0
    %1045 = vmatmul.mubr.f32.gmra.mrb[0].mxu0 %v978
    %v1046 = vpop.f32.mrb[0].mxu0
    %v1047 = vadd.f32 0.0, %v1046
    %v1048 = vpop.f32.mrb[0].mxu0
    %1049 = vdwg.mxu0
    %v1051 = vrot.slane %v1047, 2
    %v1053 = vadd.f32 %v231, %v1051
    %v1054 = vxor.u32 %v1053, 2147483648
    %v1055 = vmul.f32 %v1054, 1.442695
    %v1056 = vpow.pop %v1055
    %v1057 = vadd.f32 %v1056, 1.0
    %v1058 = vrcp.pop %v1057
    %v1059 = vmul.f32 1.0, %v1058
    %v1060 = vtanh.pop %v1053
    %v1062 = vrot.slane %v967, 6
    %v1064 = vmul.f32 %v1059, %v1062
    %1066 = vrot.lane.b32.xlu0 %v1060, 64
    %v1067 = vpop.permute.xlu0 %1066
    %v1069 = vmul.f32 %v1059, %v1067
    %1071 = vrot.lane.b32.xlu0 %v1069, 32
    %v1072 = vpop.permute.xlu0 %1071
    %v1074 = vadd.f32 %v1064, %v1072
    %v1075 = vtanh.pop %v1074
    %1077 = vrot.lane.b32.xlu0 %v1075, 64
    %v1078 = vpop.permute.xlu0 %1077
    %v1080 = vmul.f32 %v1059, %v1078
    %1082 = vrot.lane.b32.xlu0 %v444, 64
    %v1083 = vpop.permute.xlu0 %1082
    %1085 = vrot.lane.b32.xlu0 %v551, 96
    %v1086 = vpop.permute.xlu0 %1085
    %1090 = vrot.lane.b32.xlu0 %v868, 64
    %v1091 = vpop.permute.xlu0 %1090
    %1093 = vrot.lane.b32.xlu0 %v975, 96
    %v1094 = vpop.permute.xlu0 %1093
    %v1097 = vrot.slane %v1080, 6
    %v1099 = vsel %vm238, %v339, %v1083
    %vm1100 = vcmask 523264
    %v1101 = vsel %vm1100, %v1099, %v1086
    %vm1102 = vcmask 785408
    %v1103 = vsel %vm1102, %v1101, %v658
    %v1104 = vsel %vm238, %v763, %v1091
    %v1105 = vsel %vm1100, %v1104, %v1094
    %v1106 = vsel %vm1102, %v1105, %v1097
    %v1109 = vcombine.low %v1103, %v1106
    %v1111 = vunpack.c.l.s4 1983009808
    %v1112 = vunpack.c.0.s8 %v1111
    %v1113 = vlaneseq
    %v1114 = vshrl.u32 %v1113, 7
    %v1115 = vsub.s32 %v1112, %v1114
    %v1116 = vrot.slane %v1109, %v1115
    %1118 = vst [vmem:[%s8] sm:$0xf] %v1116
    %v1119 = vld [vmem:[%s5] sm:$0xff]
    %v1120 = vld [vmem:[%s5 + $0x8] sm:$0xff]
    %v1121 = vld [vmem:[%s5 + $0x10] sm:$0xff]
    %v1122 = vld [vmem:[%s5 + $0x18] sm:$0xff]
    %v1123 = vld [vmem:[%s6] sm:$0x1]
    %v1125 = vlaneseq
    %v1126 = vshrl.u32 %v1125, 7
    %v1127 = vsub.s32 0, %v1126
    %v1128 = vrot.slane %v1123, %v1127
    %1130 = vrot.lane.b32.xlu0 %v1097, 32
    %v1131 = vpop.permute.xlu0 %1130
    %v1132 = vsel %vm238, %v1131, 0
    %1134 = vmatprep.subr.mxu0 0.0
    %1135 = vmatpush1.msra.mxu0 %v1119
    %1136 = vmatprep.subr.mxu0 0.0
    %1137 = vmatpush1.msra.mxu0 %v1120
    %1138 = vmatprep.subr.mxu0 0.0
    %1139 = vmatpush1.msra.mxu0 %v1121
    %1140 = vmatprep.subr.mxu0 0.0
    %1141 = vmatpush1.msra.mxu0 %v1122
    %1142 = vmatprep.subr.mxu0 0.0
    %1143 = vmatpush1.msra.mxu0 0.0
    %1144 = vmatprep.subr.mxu0 0.0
    %1145 = vmatpush1.msra.mxu0 0.0
    %1146 = vmatprep.subr.mxu0 0.0
    %1147 = vmatpush1.msra.mxu0 0.0
    %1148 = vmatprep.subr.mxu0 0.0
    %1149 = vmatpush1.msra.mxu0 0.0
    %1150 = vmatprep.subr.mxu0 0.0
    %1151 = vmatpush1.msra.mxu0 0.0
    %1152 = vmatprep.subr.mxu0 0.0
    %1153 = vmatpush1.msra.mxu0 0.0
    %1154 = vmatprep.subr.mxu0 0.0
    %1155 = vmatpush1.msra.mxu0 0.0
    %1156 = vmatprep.subr.mxu0 0.0
    %1157 = vmatpush1.msra.mxu0 0.0
    %1158 = vmatprep.subr.mxu0 0.0
    %1159 = vmatpush1.msra.mxu0 0.0
    %1160 = vmatprep.subr.mxu0 0.0
    %1161 = vmatpush1.msra.mxu0 0.0
    %1162 = vmatprep.subr.mxu0 0.0
    %1163 = vmatpush1.msra.mxu0 0.0
    %1164 = vmatprep.subr.mxu0 0.0
    %1165 = vmatpush1.msra.mxu0 0.0
    %1166 = vmatprep.subr.mxu0 0.0
    %1167 = vmatpush1.msra.mxu0 0.0
    %1168 = vmatprep.subr.mxu0 0.0
    %1169 = vmatpush1.msra.mxu0 0.0
    %1170 = vmatprep.subr.mxu0 0.0
    %1171 = vmatpush1.msra.mxu0 0.0
    %1172 = vmatprep.subr.mxu0 0.0
    %1173 = vmatpush1.msra.mxu0 0.0
    %1174 = vmatprep.subr.mxu0 0.0
    %1175 = vmatpush1.msra.mxu0 0.0
    %1176 = vmatprep.subr.mxu0 0.0
    %1177 = vmatpush1.msra.mxu0 0.0
    %1178 = vmatprep.subr.mxu0 0.0
    %1179 = vmatpush1.msra.mxu0 0.0
    %1180 = vmatprep.subr.mxu0 0.0
    %1181 = vmatpush1.msra.mxu0 0.0
    %1182 = vmatprep.subr.mxu0 0.0
    %1183 = vmatpush1.msra.mxu0 0.0
    %1184 = vmatprep.subr.mxu0 0.0
    %1185 = vmatpush1.msra.mxu0 0.0
    %1186 = vmatprep.subr.mxu0 0.0
    %1187 = vmatpush1.msra.mxu0 0.0
    %1188 = vmatprep.subr.mxu0 0.0
    %1189 = vmatpush1.msra.mxu0 0.0
    %1190 = vmatprep.subr.mxu0 0.0
    %1191 = vmatpush1.msra.mxu0 0.0
    %1192 = vmatprep.subr.mxu0 0.0
    %1193 = vmatpush1.msra.mxu0 0.0
    %1194 = vmatprep.subr.mxu0 0.0
    %1195 = vmatpush1.msra.mxu0 0.0
    %1196 = vmatprep.subr.mxu0 0.0
    %1197 = vmatpush1.msra.mxu0 0.0
    %1198 = vmatprep.mubr.f32.mxu0 0.0
    %1199 = vmatmul.mubr.f32.gmra.mrb[0].mxu0 %v1132
    %v1200 = vpop.f32.mrb[0].mxu0
    %v1201 = vadd.f32 %v1128, %v1200
    %v1202 = vpop.f32.mrb[0].mxu0
    %1203 = vdwg.mxu0
    %vm1204 = vcmask 25600
    %1205 = vst.msk [vmem:[#allocation4] sm:$0x3] %vm1204, %v1201
    %v1206 = vsel %vm1204, %v1201, -inf
    %1207 = vmax.xlane.f32.xlu0 %v1206
    %v1208 = vpop.xlane.xlu0 %1207
    %v1209 = vsub.f32 %v1201, %v1208
    %v1210 = vmul.f32 %v1209, 1.442695
    %v1211 = vpow.pop %v1210
    %v1212 = vsel %vm1204, %v1211, 0.0
    %1213 = vadd.xlane.f32.xlu0 %v1212
    %v1214 = vpop.xlane.xlu0 %1213
    %v1215 = vlog2.pop %v1214
    %v1216 = vmul.f32 %v1215, 0.6931472
    %v1217 = vadd.f32 %v1216, %v1208
    %v1218 = vsub.f32 %v1201, %v1217
    %1219 = vst.msk [vmem:[#allocation6] sm:$0x3] %vm1204, %v1218
    // Predicated region
    $region30: #{lstm_bc_forward.1} parent=1 // pred_check
      _
    $region31: #{lstm_bc_forward.1} parent=1 // pred_check_branch
      %1221 = sbr.rel (0) target = $region33
    $region32: #{lstm_bc_forward.1} parent=1 // pred_region
      %s1223 = ssub.s32 256, 256
      %1224 = vsyncadd [#allocation3], %s1223
      %s1225 = sshll.u32 [#allocation2], 4
      %s1226 = int_to_ptr.vmem [resolvable:$true] %s1225
      %1231 = dma.vmem_to_hbm [thread:$0]  %s1226, 256, %s7, [#allocation3], 128, 128, 8
    $region33: #{lstm_bc_forward.1} parent=1 // pred_fallthru
      _
    // Predicated region
    $region34: #{lstm_bc_forward.1} parent=1 // pred_check
      _
    $region35: #{lstm_bc_forward.1} parent=1 // pred_check_branch
      %1233 = sbr.rel (0) target = $region37
    $region36: #{lstm_bc_forward.1} parent=1 // pred_region
      _
    $region37: #{lstm_bc_forward.1} parent=1 // pred_fallthru
      _
    // Predicated region
    $region38: #{lstm_bc_forward.1} parent=1 // pred_check
      _
    $region39: #{lstm_bc_forward.1} parent=1 // pred_check_branch
      %1235 = sbr.rel (0) target = $region41
    $region40: #{lstm_bc_forward.1} parent=1 // pred_region
      %s1237 = ssub.s32 32, 32
      %1238 = vsyncadd [#allocation5], %s1237
      %s1240 = sshll.u32 [#allocation4], 4
      %s1241 = int_to_ptr.vmem [resolvable:$true] %s1240
      %1243 = dma.vmem_to_hbm [thread:$0]  %s1241, 32, %s9, [#allocation5]
    $region41: #{lstm_bc_forward.1} parent=1 // pred_fallthru
      _
    // Predicated region
    $region42: #{lstm_bc_forward.1} parent=1 // pred_check
      _
    $region43: #{lstm_bc_forward.1} parent=1 // pred_check_branch
      %1245 = sbr.rel (0) target = $region45
    $region44: #{lstm_bc_forward.1} parent=1 // pred_region
      %s1247 = ssub.s32 32, 32
      %1248 = vsyncadd [#allocation5], %s1247
      %s1250 = sshll.u32 [#allocation6], 4
      %s1251 = int_to_ptr.vmem [resolvable:$true] %s1250
      %1253 = dma.vmem_to_hbm [thread:$0]  %s1251, 32, %s10, [#allocation5]
    $region45: #{lstm_bc_forward.1} parent=1 // pred_fallthru
      _
    // Predicated region
    $region46: #{lstm_bc_forward.1} parent=1 // pred_check
      _
    $region47: #{lstm_bc_forward.1} parent=1 // pred_check_branch
      %1255 = sbr.rel (0) target = $region49
    $region48: #{lstm_bc_forward.1} parent=1 // pred_region
      %1256 = dma.done [#allocation3], 256
    $region49: #{lstm_bc_forward.1} parent=1 // pred_fallthru
      _
    // Predicated region
    $region50: #{lstm_bc_forward.1} parent=1 // pred_check
      _
    $region51: #{lstm_bc_forward.1} parent=1 // pred_check_branch
      %1258 = sbr.rel (0) target = $region53
    $region52: #{lstm_bc_forward.1} parent=1 // pred_region
      _
    $region53: #{lstm_bc_forward.1} parent=1 // pred_fallthru
      _
    // Predicated region
    $region54: #{lstm_bc_forward.1} parent=1 // pred_check
      _
    $region55: #{lstm_bc_forward.1} parent=1 // pred_check_branch
      %1260 = sbr.rel (0) target = $region57
    $region56: #{lstm_bc_forward.1} parent=1 // pred_region
      %1261 = dma.done [#allocation5], 32
    $region57: #{lstm_bc_forward.1} parent=1 // pred_fallthru
      _
    // Predicated region
    $region58: #{lstm_bc_forward.1} parent=1 // pred_check
      _
    $region59: #{lstm_bc_forward.1} parent=1 // pred_check_branch
      %1263 = sbr.rel (0) target = $region61
    $region60: #{lstm_bc_forward.1} parent=1 // pred_region
      %1264 = dma.done [#allocation5], 32
    $region61: #{lstm_bc_forward.1} parent=1 // pred_fallthru
      _
    %1265 = vsyncpa [#allocation3], 1
    %1266 = vsyncpa [#allocation5], 1

</llo_original>
